<compile_context>
chip_gen: v6e
topology: v6e:2x2x1
jax: 0.10.0
libtpu: 0.0.40
codegen_flags: <defaults>
</compile_context>

<pallas_src>
import functools

import jax
import jax.numpy as jnp
from jax.experimental import pallas as pl
from jax.experimental.pallas import tpu as pltpu

EPS = 1e-5


def _cnn_block_kernel(kh_size, stride, padding, nt, h, w, c_in, c_out,
                      h_out, w_out, mm_dtype,
                      x_ref, wband_ref, wres_ref, g1_ref, b1_ref, g2_ref, b2_ref,
                      ain_ref, aout_ref, out_ref, xpad_ref):
    # Layouts:
    #   x_ref    : (NT, H, W*Cin)              f32, packed input (lane = w*Cin + c)
    #   wband_ref: (KH, W*Cin, Wo*Cout)        mm_dtype, banded conv weights
    #   wres_ref : (W*Cin, Wo*Cout)            mm_dtype, banded residual weight
    #   g1/b1    : (1, W*Cin)    g2/b2: (1, Wo*Cout)   f32, tiled BN affine params
    #   ain_ref  : (W*Cin, W*Cin)   = kron(ones(W,W),  eye(Cin))   f32
    #   aout_ref : (Wo*Cout,Wo*Cout)= kron(ones(Wo,Wo),eye(Cout))  f32
    #   out_ref  : (NT*Ho, Wo*Cout)            f32, lane-dense packed output
    #   xpad_ref : (NT, H+2p, W*Cin)           f32 scratch (H halo only)
    s = stride
    p = padding
    f32 = jnp.float32
    wc = w * c_in
    m_in = nt * h
    m_out = nt * h_out

    x3 = x_ref[...]                              # (NT, H, WC) f32, loaded once
    x2 = x3.reshape(m_in, wc)                    # (NT*H, WC)  lane-dense

    # ---- bn1 (training-mode batch stats) in the packed layout -------------------
    inv_m1 = 1.0 / float(nt * h * w)
    col_s = jnp.sum(x2, axis=0, keepdims=True)           # (1, WC) dense sublane reduce
    col_q = jnp.sum(x2 * x2, axis=0, keepdims=True)
    ain = ain_ref[...]
    mean1 = jnp.dot(col_s, ain, preferred_element_type=f32) * inv_m1   # per-channel,
    ex2_1 = jnp.dot(col_q, ain, preferred_element_type=f32) * inv_m1   # tiled over W
    var1 = ex2_1 - mean1 * mean1                                        # biased var
    scale1 = jax.lax.rsqrt(var1 + EPS) * g1_ref[...]
    shift1 = b1_ref[...] - mean1 * scale1
    xr = jnp.maximum(x2 * scale1 + shift1, 0.0)           # relu(bn1(x)), f32

    # ---- H halo padding (W padding is folded into the banded weights) -----------
    xpad_ref[:, p:p + h, :] = xr.reshape(nt, h, wc)       # interior written once
    if p > 0:
        zero_halo = jnp.zeros((nt, p, wc), f32)
        xpad_ref[:, 0:p, :] = zero_halo
        xpad_ref[:, p + h:, :] = zero_halo
    xpad = xpad_ref[...].astype(mm_dtype)                 # (NT, H+2p, WC) bf16

    # ---- main KxK conv: one banded matmul per kernel row -------------------------
    acc = None
    for kh in range(kh_size):
        rows = xpad[:, kh:kh + (h_out - 1) * s + 1:s, :]  # (NT, Ho, WC)
        part = jnp.dot(rows.reshape(m_out, wc), wband_ref[kh],
                       preferred_element_type=f32)        # (NT*Ho, Wo*Cout) f32 acc
        acc = part if acc is None else acc + part

    # ---- residual 1x1/stride conv on the *raw* input, same banded trick ----------
    if s == 1 and h_out == h:
        xres = x2                                         # stride 1: no slicing
    else:
        xres = x3[:, 0:(h_out - 1) * s + 1:s, :].reshape(m_out, wc)
    res = jnp.dot(xres.astype(mm_dtype), wres_ref[...],
                  preferred_element_type=f32)             # (NT*Ho, Wo*Cout)

    # ---- bn2 applied independently to each branch (training-mode stats) ----------
    inv_m2 = 1.0 / float(nt * h_out * w_out)
    aout = aout_ref[...]
    g2 = g2_ref[...]
    b2 = b2_ref[...]

    def bn2(z):
        cs = jnp.sum(z, axis=0, keepdims=True)
        cq = jnp.sum(z * z, axis=0, keepdims=True)
        m = jnp.dot(cs, aout, preferred_element_type=f32) * inv_m2
        e2 = jnp.dot(cq, aout, preferred_element_type=f32) * inv_m2
        v = e2 - m * m
        sc = jax.lax.rsqrt(v + EPS) * g2
        return z * sc + (b2 - m * sc)

    out_ref[...] = bn2(acc) + bn2(res)                    # lane-dense (NT*Ho, 128)


def _banded_conv_weight(w_hwio, w_in, w_out, stride, pad, dtype):
    """(KH, KW, Cin, Cout) -> (KH, W_in*Cin, W_out*Cout) block-banded matrices.

    band[kh, wi*Cin + c, wo*Cout + co] = w_hwio[kh, wi + pad - wo*stride, c, co]
    whenever that kw index is in [0, KW), else 0.  Multiplying a packed
    activation row (lane index = w*Cin + c) by band[kh] performs the conv's
    W/Cin contraction for kernel row kh and produces the packed (wo, cout)
    output lanes, with the W zero-padding folded into the structural zeros.
    """
    kh_size, kw_size, _, _ = w_hwio.shape
    wi = jnp.arange(w_in)[:, None]
    wo = jnp.arange(w_out)[None, :]
    kw = wi + pad - wo * stride                                   # (W_in, W_out)
    valid = (kw >= 0) & (kw < kw_size)
    g = w_hwio[:, jnp.clip(kw, 0, kw_size - 1), :, :]             # (KH,Win,Wout,Cin,Cout)
    g = jnp.where(valid[None, :, :, None, None], g, 0.0)
    g = jnp.transpose(g, (0, 1, 3, 2, 4))                         # (KH,Win,Cin,Wout,Cout)
    kh_, win_, cin_, wout_, cout_ = g.shape
    return g.reshape(kh_, win_ * cin_, wout_ * cout_).astype(dtype)


@functools.partial(jax.jit,
                   static_argnames=("kernel_size", "stride", "padding", "matmul_dtype"))
def cnn_block_forward(x, params, *, kernel_size, stride, padding,
                      matmul_dtype=jnp.bfloat16):
    """x: (N, T, C, H, W) float32, PyTorch channel-first convention."""
    N, T, C, H, W = x.shape
    nt = N * T
    kh = kw = kernel_size
    c_out = params["wconv"].shape[0]
    h_out = (H + 2 * padding - kh) // stride + 1
    w_out = (W + 2 * padding - kw) // stride + 1

    # The module's `x + res` requires the residual branch's spatial dims to match
    # the main conv; the kernel's row selection relies on that (no runtime OOB).
    res_h = (H - 1) // stride + 1
    res_w = (W - 1) // stride + 1
    assert (res_h, res_w) == (h_out, w_out), "residual / conv output shapes differ"

    # ---- repack to the lane-dense layouts the kernel expects ---------------------
    x_packed = jnp.transpose(x.reshape(nt, C, H, W), (0, 2, 3, 1)).reshape(nt, H, W * C)

    wconv_hwio = jnp.transpose(params["wconv"], (2, 3, 1, 0))      # (KH,KW,Cin,Cout)
    wband = _banded_conv_weight(wconv_hwio, W, w_out, stride, padding, matmul_dtype)

    wres = params.get("wres")
    if wres is None:   # identity residual (in_channels == out_channels, stride == 1)
        wres_io = jnp.eye(C, dtype=jnp.float32)
    else:
        wres_io = jnp.transpose(wres.reshape(c_out, C), (1, 0))    # (Cin, Cout)
    wres_band = _banded_conv_weight(wres_io[None, None], W, w_out, stride, 0,
                                    matmul_dtype)[0]               # (W*Cin, Wo*Cout)

    # BN affine params tiled across the packed lane axis (kept f32: VPU math is f32).
    g1t = jnp.tile(params["g1"], W).reshape(1, W * C)
    b1t = jnp.tile(params["b1"], W).reshape(1, W * C)
    g2t = jnp.tile(params["g2"], w_out).reshape(1, w_out * c_out)
    b2t = jnp.tile(params["b2"], w_out).reshape(1, w_out * c_out)

    # Group-sum-and-broadcast matrices for BN stats in the packed layout:
    #   (1, W*C) @ kron(ones(W,W), eye(C)) == per-channel sum tiled over W.
    a_in = jnp.kron(jnp.ones((W, W), jnp.float32), jnp.eye(C, dtype=jnp.float32))
    a_out = jnp.kron(jnp.ones((w_out, w_out), jnp.float32),
                     jnp.eye(c_out, dtype=jnp.float32))

    # NOTE: bconv / bres are intentionally not passed to the kernel: a per-channel
    # constant added right before a training-mode BatchNorm is cancelled exactly
    # by the mean subtraction, so the bias adds are dead work.

    kernel = functools.partial(_cnn_block_kernel, kh, stride, padding, nt, H, W,
                               C, c_out, h_out, w_out, matmul_dtype)

    vmem = pl.BlockSpec(memory_space=pltpu.MemorySpace.VMEM)
    # Grid-less, fully VMEM-resident: total footprint here is < 1 MiB, far under
    # the scoped-VMEM default of every TPU generation, so tiling would only add
    # per-step overhead at these shapes (see TODO in the header for large NT).
    out2d = pl.pallas_call(
        kernel,
        out_shape=jax.ShapeDtypeStruct((nt * h_out, w_out * c_out), jnp.float32),
        in_specs=[vmem] * 9,
        out_specs=vmem,
        scratch_shapes=[pltpu.VMEM((nt, H + 2 * padding, W * C), jnp.float32)],
        compiler_params=pltpu.CompilerParams(vmem_limit_bytes=16 * 1024 * 1024),
    )(x_packed, wband, wres_band, g1t, b1t, g2t, b2t, a_in, a_out)

    out = out2d.reshape(nt, h_out, w_out, c_out)
    out = jnp.transpose(out, (0, 3, 1, 2)).reshape(N, T, c_out, h_out, w_out)
    return out


def cnn_block_reference(x, params, *, kernel_size, stride, padding):
    """Pure-JAX reference mirroring the PyTorch forward (training-mode BN)."""
    N, T, C, H, W = x.shape
    x = x.reshape(N * T, C, H, W)

    def bn(z, gamma, beta):
        m = jnp.mean(z, axis=(0, 2, 3), keepdims=True)
        v = jnp.mean((z - m) ** 2, axis=(0, 2, 3), keepdims=True)
        return ((z - m) / jnp.sqrt(v + EPS)) * gamma[None, :, None, None] \
            + beta[None, :, None, None]

    res = jax.lax.conv_general_dilated(
        x, params["wres"], (stride, stride), "VALID",
        dimension_numbers=("NCHW", "OIHW", "NCHW"),
        precision=jax.lax.Precision.HIGHEST)
    res = res + params["bres"][None, :, None, None]
    res = bn(res, params["g2"], params["b2"])

    h = jax.nn.relu(bn(x, params["g1"], params["b1"]))
    h = jax.lax.conv_general_dilated(
        h, params["wconv"], (stride, stride),
        [(padding, padding), (padding, padding)],
        dimension_numbers=("NCHW", "OIHW", "NCHW"),
        precision=jax.lax.Precision.HIGHEST)
    h = h + params["bconv"][None, :, None, None]
    h = bn(h, params["g2"], params["b2"])

    out = h + res
    Co, Ho, Wo = out.shape[1:]
    return out.reshape(N, T, Co, Ho, Wo)


def init_params(key, in_channels, out_channels, kernel_size):
    """Deterministic synthetic parameters with the module's shapes (torch layouts)."""
    ks = jax.random.split(key, 8)
    return {
        "wconv": 0.1 * jax.random.normal(
            ks[0], (out_channels, in_channels, kernel_size, kernel_size), jnp.float32),
        "bconv": 0.1 * jax.random.normal(ks[1], (out_channels,), jnp.float32),
        # residual 1x1 conv (used because in_channels != out_channels here);
        # omit "wres" from the dict to get the identity-residual case.
        "wres": 0.1 * jax.random.normal(
            ks[2], (out_channels, in_channels, 1, 1), jnp.float32),
        "bres": 0.1 * jax.random.normal(ks[3], (out_channels,), jnp.float32),
        "g1": 1.0 + 0.1 * jax.random.normal(ks[4], (in_channels,), jnp.float32),
        "b1": 0.1 * jax.random.normal(ks[5], (in_channels,), jnp.float32),
        "g2": 1.0 + 0.1 * jax.random.normal(ks[6], (out_channels,), jnp.float32),
        "b2": 0.1 * jax.random.normal(ks[7], (out_channels,), jnp.float32),
    }


if __name__ == "__main__":
    # CNNBlock(in_channels=4, out_channels=8, kernel_size=3, stride=1, padding=1)
    in_channels, out_channels = 4, 8
    kernel_size, stride, padding = 3, 1, 1
    N, T, H, W = 2, 3, 16, 16

    key = jax.random.PRNGKey(0)
    kx, kp = jax.random.split(key)
    x = jax.random.normal(kx, (N, T, in_channels, H, W), jnp.float32)
    params = init_params(kp, in_channels, out_channels, kernel_size)

    out = cnn_block_forward(x, params, kernel_size=kernel_size, stride=stride,
                            padding=padding, matmul_dtype=jnp.bfloat16)
    out = jax.block_until_ready(out)

    ref = cnn_block_reference(x, params, kernel_size=kernel_size, stride=stride,
                              padding=padding)
    ref = jax.block_until_ready(ref)

    assert out.shape == (N, T, out_channels, H, W), out.shape
    # bf16 MXU operands (per v6e/v7x perf guidance) -> 2e-2 tolerance vs the f32
    # reference; all BN / elementwise math inside the kernel remains f32.
    assert jnp.allclose(out, ref, rtol=2e-2, atol=2e-2), \
        float(jnp.max(jnp.abs(out - ref)))

    print("KERNEL_OK")
</pallas_src>

<mosaic_0001>
module attributes {stable_mosaic.version = 11 : i64} {
  func.func @_cnn_block_kernel(%arg0: memref<6x16x64xf32, #tpu.memory_space<vmem>>, %arg1: memref<3x64x128xbf16, #tpu.memory_space<vmem>>, %arg2: memref<64x128xbf16, #tpu.memory_space<vmem>>, %arg3: memref<1x64xf32, #tpu.memory_space<vmem>>, %arg4: memref<1x64xf32, #tpu.memory_space<vmem>>, %arg5: memref<1x128xf32, #tpu.memory_space<vmem>>, %arg6: memref<1x128xf32, #tpu.memory_space<vmem>>, %arg7: memref<64x64xf32, #tpu.memory_space<vmem>>, %arg8: memref<128x128xf32, #tpu.memory_space<vmem>>, %arg9: memref<96x128xf32, #tpu.memory_space<vmem>>, %arg10: memref<6x18x64xf32, #tpu.memory_space<vmem>>) attributes {dimension_semantics = [], scalar_prefetch = 0 : i64, scratch_operands = 1 : i64, tpu.core_type = #tpu.core_type<tc>} {
    %c0 = arith.constant 0 : index
    %c0_0 = arith.constant 0 : index
    %c0_1 = arith.constant 0 : index
    %0 = vector.load %arg0[%c0, %c0_0, %c0_1] : memref<6x16x64xf32, #tpu.memory_space<vmem>>, vector<6x16x64xf32>
    %1 = vector.shape_cast %0 : vector<6x16x64xf32> to vector<96x64xf32>
    %cst = arith.constant dense<0.000000e+00> : vector<64xf32>
    %2 = vector.multi_reduction <add>, %1, %cst [0] : vector<96x64xf32> to vector<64xf32>
    %3 = vector.shape_cast %2 : vector<64xf32> to vector<1x64xf32>
    %4 = arith.mulf %1, %1 : vector<96x64xf32>
    %cst_2 = arith.constant dense<0.000000e+00> : vector<64xf32>
    %5 = vector.multi_reduction <add>, %4, %cst_2 [0] : vector<96x64xf32> to vector<64xf32>
    %6 = vector.shape_cast %5 : vector<64xf32> to vector<1x64xf32>
    %c0_3 = arith.constant 0 : index
    %c0_4 = arith.constant 0 : index
    %7 = vector.load %arg7[%c0_3, %c0_4] : memref<64x64xf32, #tpu.memory_space<vmem>>, vector<64x64xf32>
    %cst_5 = arith.constant dense<0.000000e+00> : vector<1x64xf32>
    %8 = tpu.matmul %3, %7, %cst_5 {dimension_numbers = #tpu.dot_dimension_numbers<[1], [0], [0], [1], [0, 0, 1, 1], [], []>} : vector<1x64xf32>, vector<64x64xf32>, vector<1x64xf32> -> vector<1x64xf32>
    %cst_6 = arith.constant 6.51041686E-4 : f32
    %9 = vector.broadcast %cst_6 : f32 to vector<1x64xf32>
    %10 = arith.mulf %8, %9 : vector<1x64xf32>
    %cst_7 = arith.constant dense<0.000000e+00> : vector<1x64xf32>
    %11 = tpu.matmul %6, %7, %cst_7 {dimension_numbers = #tpu.dot_dimension_numbers<[1], [0], [0], [1], [0, 0, 1, 1], [], []>} : vector<1x64xf32>, vector<64x64xf32>, vector<1x64xf32> -> vector<1x64xf32>
    %cst_8 = arith.constant 6.51041686E-4 : f32
    %12 = vector.broadcast %cst_8 : f32 to vector<1x64xf32>
    %13 = arith.mulf %11, %12 : vector<1x64xf32>
    %14 = arith.mulf %10, %10 : vector<1x64xf32>
    %15 = arith.subf %13, %14 : vector<1x64xf32>
    %cst_9 = arith.constant 9.99999974E-6 : f32
    %16 = vector.broadcast %cst_9 : f32 to vector<1x64xf32>
    %17 = arith.addf %15, %16 : vector<1x64xf32>
    %18 = math.rsqrt %17 : vector<1x64xf32>
    %c0_10 = arith.constant 0 : index
    %c0_11 = arith.constant 0 : index
    %19 = vector.load %arg3[%c0_10, %c0_11] : memref<1x64xf32, #tpu.memory_space<vmem>>, vector<1x64xf32>
    %20 = arith.mulf %18, %19 : vector<1x64xf32>
    %c0_12 = arith.constant 0 : index
    %c0_13 = arith.constant 0 : index
    %21 = vector.load %arg4[%c0_12, %c0_13] : memref<1x64xf32, #tpu.memory_space<vmem>>, vector<1x64xf32>
    %22 = arith.mulf %10, %20 : vector<1x64xf32>
    %23 = arith.subf %21, %22 : vector<1x64xf32>
    %24 = vector.broadcast %20 : vector<1x64xf32> to vector<96x64xf32>
    %25 = arith.mulf %1, %24 : vector<96x64xf32>
    %26 = vector.broadcast %23 : vector<1x64xf32> to vector<96x64xf32>
    %27 = arith.addf %25, %26 : vector<96x64xf32>
    %cst_14 = arith.constant 0.000000e+00 : f32
    %28 = vector.broadcast %cst_14 : f32 to vector<96x64xf32>
    %29 = arith.maximumf %27, %28 : vector<96x64xf32>
    %30 = vector.shape_cast %29 : vector<96x64xf32> to vector<6x16x64xf32>
    %c0_15 = arith.constant 0 : index
    %c1 = arith.constant 1 : index
    %c0_16 = arith.constant 0 : index
    %31 = vector.load %arg10[%c0_15, %c1, %c0_16] : memref<6x18x64xf32, #tpu.memory_space<vmem>>, vector<6x16x64xf32>
    tpu.vector_store %arg10[%c0_15, %c1, %c0_16], %30 {strides = array<i32>} : memref<6x18x64xf32, #tpu.memory_space<vmem>>, vector<6x16x64xf32>,
    %cst_17 = arith.constant 0.000000e+00 : f32
    %32 = vector.broadcast %cst_17 : f32 to vector<6x1x64xf32>
    %c0_18 = arith.constant 0 : index
    %c0_19 = arith.constant 0 : index
    %c0_20 = arith.constant 0 : index
    %33 = vector.load %arg10[%c0_18, %c0_19, %c0_20] : memref<6x18x64xf32, #tpu.memory_space<vmem>>, vector<6x1x64xf32>
    tpu.vector_store %arg10[%c0_18, %c0_19, %c0_20], %32 {strides = array<i32>} : memref<6x18x64xf32, #tpu.memory_space<vmem>>, vector<6x1x64xf32>,
    %c0_21 = arith.constant 0 : index
    %c17 = arith.constant 17 : index
    %c0_22 = arith.constant 0 : index
    %34 = vector.load %arg10[%c0_21, %c17, %c0_22] : memref<6x18x64xf32, #tpu.memory_space<vmem>>, vector<6x1x64xf32>
    tpu.vector_store %arg10[%c0_21, %c17, %c0_22], %32 {strides = array<i32>} : memref<6x18x64xf32, #tpu.memory_space<vmem>>, vector<6x1x64xf32>,
    %c0_23 = arith.constant 0 : index
    %c0_24 = arith.constant 0 : index
    %c0_25 = arith.constant 0 : index
    %35 = vector.load %arg10[%c0_23, %c0_24, %c0_25] : memref<6x18x64xf32, #tpu.memory_space<vmem>>, vector<6x18x64xf32>
    %36 = arith.truncf %35 : vector<6x18x64xf32> to vector<6x18x64xbf16>
    %37 = vector.extract_strided_slice %36 {offsets = [0, 0, 0], sizes = [6, 16, 64], strides = [1, 1, 1]} : vector<6x18x64xbf16> to vector<6x16x64xbf16>
    %38 = vector.shape_cast %37 : vector<6x16x64xbf16> to vector<96x64xbf16>
    %c0_26 = arith.constant 0 : index
    %c0_27 = arith.constant 0 : index
    %c0_28 = arith.constant 0 : index
    %39 = vector.load %arg1[%c0_26, %c0_27, %c0_28] : memref<3x64x128xbf16, #tpu.memory_space<vmem>>, vector<1x64x128xbf16>
    %40 = vector.shape_cast %39 : vector<1x64x128xbf16> to vector<64x128xbf16>
    %cst_29 = arith.constant dense<0.000000e+00> : vector<96x128xf32>
    %41 = tpu.matmul %38, %40, %cst_29 {dimension_numbers = #tpu.dot_dimension_numbers<[1], [0], [0], [1], [0, 0, 1, 1], [], []>} : vector<96x64xbf16>, vector<64x128xbf16>, vector<96x128xf32> -> vector<96x128xf32>
    %42 = vector.extract_strided_slice %36 {offsets = [0, 1, 0], sizes = [6, 16, 64], strides = [1, 1, 1]} : vector<6x18x64xbf16> to vector<6x16x64xbf16>
    %43 = vector.shape_cast %42 : vector<6x16x64xbf16> to vector<96x64xbf16>
    %c1_30 = arith.constant 1 : index
    %c0_31 = arith.constant 0 : index
    %c0_32 = arith.constant 0 : index
    %44 = vector.load %arg1[%c1_30, %c0_31, %c0_32] : memref<3x64x128xbf16, #tpu.memory_space<vmem>>, vector<1x64x128xbf16>
    %45 = vector.shape_cast %44 : vector<1x64x128xbf16> to vector<64x128xbf16>
    %cst_33 = arith.constant dense<0.000000e+00> : vector<96x128xf32>
    %46 = tpu.matmul %43, %45, %cst_33 {dimension_numbers = #tpu.dot_dimension_numbers<[1], [0], [0], [1], [0, 0, 1, 1], [], []>} : vector<96x64xbf16>, vector<64x128xbf16>, vector<96x128xf32> -> vector<96x128xf32>
    %47 = arith.addf %41, %46 : vector<96x128xf32>
    %48 = vector.extract_strided_slice %36 {offsets = [0, 2, 0], sizes = [6, 16, 64], strides = [1, 1, 1]} : vector<6x18x64xbf16> to vector<6x16x64xbf16>
    %49 = vector.shape_cast %48 : vector<6x16x64xbf16> to vector<96x64xbf16>
    %c2 = arith.constant 2 : index
    %c0_34 = arith.constant 0 : index
    %c0_35 = arith.constant 0 : index
    %50 = vector.load %arg1[%c2, %c0_34, %c0_35] : memref<3x64x128xbf16, #tpu.memory_space<vmem>>, vector<1x64x128xbf16>
    %51 = vector.shape_cast %50 : vector<1x64x128xbf16> to vector<64x128xbf16>
    %cst_36 = arith.constant dense<0.000000e+00> : vector<96x128xf32>
    %52 = tpu.matmul %49, %51, %cst_36 {dimension_numbers = #tpu.dot_dimension_numbers<[1], [0], [0], [1], [0, 0, 1, 1], [], []>} : vector<96x64xbf16>, vector<64x128xbf16>, vector<96x128xf32> -> vector<96x128xf32>
    %53 = arith.addf %47, %52 : vector<96x128xf32>
    %54 = arith.truncf %1 : vector<96x64xf32> to vector<96x64xbf16>
    %c0_37 = arith.constant 0 : index
    %c0_38 = arith.constant 0 : index
    %55 = vector.load %arg2[%c0_37, %c0_38] : memref<64x128xbf16, #tpu.memory_space<vmem>>, vector<64x128xbf16>
    %cst_39 = arith.constant dense<0.000000e+00> : vector<96x128xf32>
    %56 = tpu.matmul %54, %55, %cst_39 {dimension_numbers = #tpu.dot_dimension_numbers<[1], [0], [0], [1], [0, 0, 1, 1], [], []>} : vector<96x64xbf16>, vector<64x128xbf16>, vector<96x128xf32> -> vector<96x128xf32>
    %c0_40 = arith.constant 0 : index
    %c0_41 = arith.constant 0 : index
    %57 = vector.load %arg8[%c0_40, %c0_41] : memref<128x128xf32, #tpu.memory_space<vmem>>, vector<128x128xf32>
    %c0_42 = arith.constant 0 : index
    %c0_43 = arith.constant 0 : index
    %58 = vector.load %arg5[%c0_42, %c0_43] : memref<1x128xf32, #tpu.memory_space<vmem>>, vector<1x128xf32>
    %c0_44 = arith.constant 0 : index
    %c0_45 = arith.constant 0 : index
    %59 = vector.load %arg6[%c0_44, %c0_45] : memref<1x128xf32, #tpu.memory_space<vmem>>, vector<1x128xf32>
    %cst_46 = arith.constant dense<0.000000e+00> : vector<128xf32>
    %60 = vector.multi_reduction <add>, %53, %cst_46 [0] : vector<96x128xf32> to vector<128xf32>
    %61 = vector.shape_cast %60 : vector<128xf32> to vector<1x128xf32>
    %62 = arith.mulf %53, %53 : vector<96x128xf32>
    %cst_47 = arith.constant dense<0.000000e+00> : vector<128xf32>
    %63 = vector.multi_reduction <add>, %62, %cst_47 [0] : vector<96x128xf32> to vector<128xf32>
    %64 = vector.shape_cast %63 : vector<128xf32> to vector<1x128xf32>
    %cst_48 = arith.constant dense<0.000000e+00> : vector<1x128xf32>
    %65 = tpu.matmul %61, %57, %cst_48 {dimension_numbers = #tpu.dot_dimension_numbers<[1], [0], [0], [1], [0, 0, 1, 1], [], []>} : vector<1x128xf32>, vector<128x128xf32>, vector<1x128xf32> -> vector<1x128xf32>
    %cst_49 = arith.constant 6.51041686E-4 : f32
    %66 = vector.broadcast %cst_49 : f32 to vector<1x128xf32>
    %67 = arith.mulf %65, %66 : vector<1x128xf32>
    %cst_50 = arith.constant dense<0.000000e+00> : vector<1x128xf32>
    %68 = tpu.matmul %64, %57, %cst_50 {dimension_numbers = #tpu.dot_dimension_numbers<[1], [0], [0], [1], [0, 0, 1, 1], [], []>} : vector<1x128xf32>, vector<128x128xf32>, vector<1x128xf32> -> vector<1x128xf32>
    %cst_51 = arith.constant 6.51041686E-4 : f32
    %69 = vector.broadcast %cst_51 : f32 to vector<1x128xf32>
    %70 = arith.mulf %68, %69 : vector<1x128xf32>
    %71 = arith.mulf %67, %67 : vector<1x128xf32>
    %72 = arith.subf %70, %71 : vector<1x128xf32>
    %cst_52 = arith.constant 9.99999974E-6 : f32
    %73 = vector.broadcast %cst_52 : f32 to vector<1x128xf32>
    %74 = arith.addf %72, %73 : vector<1x128xf32>
    %75 = math.rsqrt %74 : vector<1x128xf32>
    %76 = arith.mulf %75, %58 : vector<1x128xf32>
    %77 = vector.broadcast %76 : vector<1x128xf32> to vector<96x128xf32>
    %78 = arith.mulf %53, %77 : vector<96x128xf32>
    %79 = arith.mulf %67, %76 : vector<1x128xf32>
    %80 = arith.subf %59, %79 : vector<1x128xf32>
    %81 = vector.broadcast %80 : vector<1x128xf32> to vector<96x128xf32>
    %82 = arith.addf %78, %81 : vector<96x128xf32>
    %cst_53 = arith.constant dense<0.000000e+00> : vector<128xf32>
    %83 = vector.multi_reduction <add>, %56, %cst_53 [0] : vector<96x128xf32> to vector<128xf32>
    %84 = vector.shape_cast %83 : vector<128xf32> to vector<1x128xf32>
    %85 = arith.mulf %56, %56 : vector<96x128xf32>
    %cst_54 = arith.constant dense<0.000000e+00> : vector<128xf32>
    %86 = vector.multi_reduction <add>, %85, %cst_54 [0] : vector<96x128xf32> to vector<128xf32>
    %87 = vector.shape_cast %86 : vector<128xf32> to vector<1x128xf32>
    %cst_55 = arith.constant dense<0.000000e+00> : vector<1x128xf32>
    %88 = tpu.matmul %84, %57, %cst_55 {dimension_numbers = #tpu.dot_dimension_numbers<[1], [0], [0], [1], [0, 0, 1, 1], [], []>} : vector<1x128xf32>, vector<128x128xf32>, vector<1x128xf32> -> vector<1x128xf32>
    %cst_56 = arith.constant 6.51041686E-4 : f32
    %89 = vector.broadcast %cst_56 : f32 to vector<1x128xf32>
    %90 = arith.mulf %88, %89 : vector<1x128xf32>
    %cst_57 = arith.constant dense<0.000000e+00> : vector<1x128xf32>
    %91 = tpu.matmul %87, %57, %cst_57 {dimension_numbers = #tpu.dot_dimension_numbers<[1], [0], [0], [1], [0, 0, 1, 1], [], []>} : vector<1x128xf32>, vector<128x128xf32>, vector<1x128xf32> -> vector<1x128xf32>
    %cst_58 = arith.constant 6.51041686E-4 : f32
    %92 = vector.broadcast %cst_58 : f32 to vector<1x128xf32>
    %93 = arith.mulf %91, %92 : vector<1x128xf32>
    %94 = arith.mulf %90, %90 : vector<1x128xf32>
    %95 = arith.subf %93, %94 : vector<1x128xf32>
    %cst_59 = arith.constant 9.99999974E-6 : f32
    %96 = vector.broadcast %cst_59 : f32 to vector<1x128xf32>
    %97 = arith.addf %95, %96 : vector<1x128xf32>
    %98 = math.rsqrt %97 : vector<1x128xf32>
    %99 = arith.mulf %98, %58 : vector<1x128xf32>
    %100 = vector.broadcast %99 : vector<1x128xf32> to vector<96x128xf32>
    %101 = arith.mulf %56, %100 : vector<96x128xf32>
    %102 = arith.mulf %90, %99 : vector<1x128xf32>
    %103 = arith.subf %59, %102 : vector<1x128xf32>
    %104 = vector.broadcast %103 : vector<1x128xf32> to vector<96x128xf32>
    %105 = arith.addf %101, %104 : vector<96x128xf32>
    %106 = arith.addf %82, %105 : vector<96x128xf32>
    %c0_60 = arith.constant 0 : index
    %c0_61 = arith.constant 0 : index
    %107 = vector.load %arg9[%c0_60, %c0_61] : memref<96x128xf32, #tpu.memory_space<vmem>>, vector<96x128xf32>
    tpu.vector_store %arg9[%c0_60, %c0_61], %106 {strides = array<i32>} : memref<96x128xf32, #tpu.memory_space<vmem>>, vector<96x128xf32>,
    return
  }
}

</mosaic_0001>

<llo_original>
// kernel: tile.23
$region0: #{tile.23}
  #allocation0 [shape = 's32[1]{0}', space=sflag, size = 0x4, scoped, tag = 'scoped memory for tile.23']
  %s0 = inlined_call_operand.vmem [shape: f32[4], index: 0, kind: input, shape index: {}]
  %s1 = inlined_call_operand.vmem [shape: f32[16,4], index: 1, kind: output, shape index: {}]
  // Predicated region
  $region2: #{tile.23} parent=0 // pred_check
    _
  $region3: #{tile.23} parent=0 // pred_check_branch
    %3 = sbr.rel (0) target = $region5
  $region4: #{tile.23} parent=0 // pred_region
    _
  $region5: #{tile.23} parent=0 // pred_fallthru
    _
  %v4 = vld [vmem:[%s0] ss:$0 sm:$0xff]
  %5 = vst [vmem:[%s1] sm:$0xff] %v4
  %s6 = scalar_lea.vmem %s1, 8
  %7 = vst [vmem:[%s6] sm:$0xff] %v4

// kernel: tile.24
$region0: #{tile.24}
  %s0 = inlined_call_operand.vmem [shape: f32[16,4], index: 0, kind: input, shape index: {}]
  %s1 = inlined_call_operand.vmem [shape: f32[1,64], index: 1, kind: output, shape index: {}]
  $region1: #{tile.24} parent=0
    #allocation0 [shape = 'u8[4096]{0}', space=vmem, size = 0x1000, scoped, tag = 'scoped mem for output reshape']
    %v2 = vld [vmem:[%s0] sm:$0x1]
    %vm3 = vcmask 31744
    %4 = vst.msk [vmem:[#allocation0] sm:$0x1] %vm3, %v2
    %s5 = scalar_lea.vmem %s0, 15
    %v6 = vld [vmem:[%s5] sm:$0x1]
    %7 = vrot.lane.b32.xlu0 %v6, 60
    %v8 = vpop.permute.xlu0 %7
    %vm9 = vcmask 523744
    %10 = vst.msk [vmem:[#allocation0] sm:$0x1] %vm9, %v8
    %s11 = scalar_lea.vmem %s0, 14
    %v12 = vld [vmem:[%s11] sm:$0x1]
    %13 = vrot.lane.b32.xlu0 %v12, 56
    %v14 = vpop.permute.xlu0 %13
    %vm15 = vcmask 490944
    %16 = vst.msk [vmem:[#allocation0] sm:$0x1] %vm15, %v14
    %s17 = scalar_lea.vmem %s0, 13
    %v18 = vld [vmem:[%s17] sm:$0x1]
    %19 = vrot.lane.b32.xlu0 %v18, 52
    %v20 = vpop.permute.xlu0 %19
    %vm21 = vcmask 458144
    %22 = vst.msk [vmem:[#allocation0] sm:$0x1] %vm21, %v20
    %s23 = scalar_lea.vmem %s0, 12
    %v24 = vld [vmem:[%s23] sm:$0x1]
    %25 = vrot.lane.b32.xlu0 %v24, 48
    %v26 = vpop.permute.xlu0 %25
    %vm27 = vcmask 425344
    %28 = vst.msk [vmem:[#allocation0] sm:$0x1] %vm27, %v26
    %s29 = scalar_lea.vmem %s0, 11
    %v30 = vld [vmem:[%s29] sm:$0x1]
    %31 = vrot.lane.b32.xlu0 %v30, 44
    %v32 = vpop.permute.xlu0 %31
    %vm33 = vcmask 392544
    %34 = vst.msk [vmem:[#allocation0] sm:$0x1] %vm33, %v32
    %s35 = scalar_lea.vmem %s0, 10
    %v36 = vld [vmem:[%s35] sm:$0x1]
    %37 = vrot.lane.b32.xlu0 %v36, 40
    %v38 = vpop.permute.xlu0 %37
    %vm39 = vcmask 359744
    %40 = vst.msk [vmem:[#allocation0] sm:$0x1] %vm39, %v38
    %s41 = scalar_lea.vmem %s0, 9
    %v42 = vld [vmem:[%s41] sm:$0x1]
    %43 = vrot.lane.b32.xlu0 %v42, 36
    %v44 = vpop.permute.xlu0 %43
    %vm45 = vcmask 326944
    %46 = vst.msk [vmem:[#allocation0] sm:$0x1] %vm45, %v44
    %s47 = scalar_lea.vmem %s0, 8
    %v48 = vld [vmem:[%s47] sm:$0x1]
    %49 = vrot.lane.b32.xlu0 %v48, 32
    %v50 = vpop.permute.xlu0 %49
    %vm51 = vcmask 294144
    %52 = vst.msk [vmem:[#allocation0] sm:$0x1] %vm51, %v50
    %s53 = scalar_lea.vmem %s0, 7
    %v54 = vld [vmem:[%s53] sm:$0x1]
    %55 = vrot.lane.b32.xlu0 %v54, 28
    %v56 = vpop.permute.xlu0 %55
    %vm57 = vcmask 261344
    %58 = vst.msk [vmem:[#allocation0] sm:$0x1] %vm57, %v56
    %s59 = scalar_lea.vmem %s0, 6
    %v60 = vld [vmem:[%s59] sm:$0x1]
    %61 = vrot.lane.b32.xlu0 %v60, 24
    %v62 = vpop.permute.xlu0 %61
    %vm63 = vcmask 228544
    %64 = vst.msk [vmem:[#allocation0] sm:$0x1] %vm63, %v62
    %s65 = scalar_lea.vmem %s0, 5
    %v66 = vld [vmem:[%s65] sm:$0x1]
    %67 = vrot.lane.b32.xlu0 %v66, 20
    %v68 = vpop.permute.xlu0 %67
    %vm69 = vcmask 195744
    %70 = vst.msk [vmem:[#allocation0] sm:$0x1] %vm69, %v68
    %s71 = scalar_lea.vmem %s0, 4
    %v72 = vld [vmem:[%s71] sm:$0x1]
    %73 = vrot.lane.b32.xlu0 %v72, 16
    %v74 = vpop.permute.xlu0 %73
    %vm75 = vcmask 162944
    %76 = vst.msk [vmem:[#allocation0] sm:$0x1] %vm75, %v74
    %s77 = scalar_lea.vmem %s0, 3
    %v78 = vld [vmem:[%s77] sm:$0x1]
    %79 = vrot.lane.b32.xlu0 %v78, 12
    %v80 = vpop.permute.xlu0 %79
    %vm81 = vcmask 130144
    %82 = vst.msk [vmem:[#allocation0] sm:$0x1] %vm81, %v80
    %s83 = scalar_lea.vmem %s0, 2
    %v84 = vld [vmem:[%s83] sm:$0x1]
    %85 = vrot.lane.b32.xlu0 %v84, 8
    %v86 = vpop.permute.xlu0 %85
    %vm87 = vcmask 97344
    %88 = vst.msk [vmem:[#allocation0] sm:$0x1] %vm87, %v86
    %s89 = scalar_lea.vmem %s0, 1
    %v90 = vld [vmem:[%s89] sm:$0x1]
    %91 = vrot.lane.b32.xlu0 %v90, 4
    %v92 = vpop.permute.xlu0 %91
    %vm93 = vcmask 64544
    %94 = vst.msk [vmem:[#allocation0] sm:$0x1] %vm93, %v92
    %s96 = sshll.u32 1, 1
    %s97 = ssub.s32 %s96, 1
    %v99 = vld [vmem:[#allocation0] sm:%s97]
    %s100 = sshll.u32 1, 1
    %s101 = ssub.s32 %s100, 1
    %102 = vst [vmem:[%s1] sm:%s101] %v99

// kernel: tile.33
$region0: #{tile.33}
  #allocation0 [shape = 's32[1]{0}', space=sflag, size = 0x4, scoped, tag = 'scoped memory for tile.33']
  %s0 = inlined_call_operand.vmem [shape: f32[8], index: 0, kind: input, shape index: {}]
  %s1 = inlined_call_operand.vmem [shape: f32[16,8], index: 1, kind: output, shape index: {}]
  // Predicated region
  $region2: #{tile.33} parent=0 // pred_check
    _
  $region3: #{tile.33} parent=0 // pred_check_branch
    %3 = sbr.rel (0) target = $region5
  $region4: #{tile.33} parent=0 // pred_region
    _
  $region5: #{tile.33} parent=0 // pred_fallthru
    _
  %v4 = vld [vmem:[%s0] ss:$0 sm:$0xff]
  %5 = vst [vmem:[%s1] sm:$0xff] %v4
  %s6 = scalar_lea.vmem %s1, 8
  %7 = vst [vmem:[%s6] sm:$0xff] %v4

// kernel: tile.34
$region0: #{tile.34}
  %s0 = inlined_call_operand.vmem [shape: f32[16,8], index: 0, kind: input, shape index: {}]
  %s1 = inlined_call_operand.vmem [shape: f32[1,128], index: 1, kind: output, shape index: {}]
  $region1: #{tile.34} parent=0
    #allocation0 [shape = 'u8[4096]{0}', space=vmem, size = 0x1000, scoped, tag = 'scoped mem for output reshape']
    %v2 = vld [vmem:[%s0] sm:$0x1]
    %vm3 = vcmask 64512
    %4 = vst.msk [vmem:[#allocation0] sm:$0x1] %vm3, %v2
    %s5 = scalar_lea.vmem %s0, 15
    %v6 = vld [vmem:[%s5] sm:$0x1]
    %7 = vrot.lane.b32.xlu0 %v6, 120
    %v8 = vpop.permute.xlu0 %7
    %vm9 = vcmask 1048512
    %10 = vst.msk [vmem:[#allocation0] sm:$0x1] %vm9, %v8
    %s11 = scalar_lea.vmem %s0, 14
    %v12 = vld [vmem:[%s11] sm:$0x1]
    %13 = vrot.lane.b32.xlu0 %v12, 112
    %v14 = vpop.permute.xlu0 %13
    %vm15 = vcmask 982912
    %16 = vst.msk [vmem:[#allocation0] sm:$0x1] %vm15, %v14
    %s17 = scalar_lea.vmem %s0, 13
    %v18 = vld [vmem:[%s17] sm:$0x1]
    %19 = vrot.lane.b32.xlu0 %v18, 104
    %v20 = vpop.permute.xlu0 %19
    %vm21 = vcmask 917312
    %22 = vst.msk [vmem:[#allocation0] sm:$0x1] %vm21, %v20
    %s23 = scalar_lea.vmem %s0, 12
    %v24 = vld [vmem:[%s23] sm:$0x1]
    %25 = vrot.lane.b32.xlu0 %v24, 96
    %v26 = vpop.permute.xlu0 %25
    %vm27 = vcmask 851712
    %28 = vst.msk [vmem:[#allocation0] sm:$0x1] %vm27, %v26
    %s29 = scalar_lea.vmem %s0, 11
    %v30 = vld [vmem:[%s29] sm:$0x1]
    %31 = vrot.lane.b32.xlu0 %v30, 88
    %v32 = vpop.permute.xlu0 %31
    %vm33 = vcmask 786112
    %34 = vst.msk [vmem:[#allocation0] sm:$0x1] %vm33, %v32
    %s35 = scalar_lea.vmem %s0, 10
    %v36 = vld [vmem:[%s35] sm:$0x1]
    %37 = vrot.lane.b32.xlu0 %v36, 80
    %v38 = vpop.permute.xlu0 %37
    %vm39 = vcmask 720512
    %40 = vst.msk [vmem:[#allocation0] sm:$0x1] %vm39, %v38
    %s41 = scalar_lea.vmem %s0, 9
    %v42 = vld [vmem:[%s41] sm:$0x1]
    %43 = vrot.lane.b32.xlu0 %v42, 72
    %v44 = vpop.permute.xlu0 %43
    %vm45 = vcmask 654912
    %46 = vst.msk [vmem:[#allocation0] sm:$0x1] %vm45, %v44
    %s47 = scalar_lea.vmem %s0, 8
    %v48 = vld [vmem:[%s47] sm:$0x1]
    %49 = vrot.lane.b32.xlu0 %v48, 64
    %v50 = vpop.permute.xlu0 %49
    %vm51 = vcmask 589312
    %52 = vst.msk [vmem:[#allocation0] sm:$0x1] %vm51, %v50
    %s53 = scalar_lea.vmem %s0, 7
    %v54 = vld [vmem:[%s53] sm:$0x1]
    %55 = vrot.lane.b32.xlu0 %v54, 56
    %v56 = vpop.permute.xlu0 %55
    %vm57 = vcmask 523712
    %58 = vst.msk [vmem:[#allocation0] sm:$0x1] %vm57, %v56
    %s59 = scalar_lea.vmem %s0, 6
    %v60 = vld [vmem:[%s59] sm:$0x1]
    %61 = vrot.lane.b32.xlu0 %v60, 48
    %v62 = vpop.permute.xlu0 %61
    %vm63 = vcmask 458112
    %64 = vst.msk [vmem:[#allocation0] sm:$0x1] %vm63, %v62
    %s65 = scalar_lea.vmem %s0, 5
    %v66 = vld [vmem:[%s65] sm:$0x1]
    %67 = vrot.lane.b32.xlu0 %v66, 40
    %v68 = vpop.permute.xlu0 %67
    %vm69 = vcmask 392512
    %70 = vst.msk [vmem:[#allocation0] sm:$0x1] %vm69, %v68
    %s71 = scalar_lea.vmem %s0, 4
    %v72 = vld [vmem:[%s71] sm:$0x1]
    %73 = vrot.lane.b32.xlu0 %v72, 32
    %v74 = vpop.permute.xlu0 %73
    %vm75 = vcmask 326912
    %76 = vst.msk [vmem:[#allocation0] sm:$0x1] %vm75, %v74
    %s77 = scalar_lea.vmem %s0, 3
    %v78 = vld [vmem:[%s77] sm:$0x1]
    %79 = vrot.lane.b32.xlu0 %v78, 24
    %v80 = vpop.permute.xlu0 %79
    %vm81 = vcmask 261312
    %82 = vst.msk [vmem:[#allocation0] sm:$0x1] %vm81, %v80
    %s83 = scalar_lea.vmem %s0, 2
    %v84 = vld [vmem:[%s83] sm:$0x1]
    %85 = vrot.lane.b32.xlu0 %v84, 16
    %v86 = vpop.permute.xlu0 %85
    %vm87 = vcmask 195712
    %88 = vst.msk [vmem:[#allocation0] sm:$0x1] %vm87, %v86
    %s89 = scalar_lea.vmem %s0, 1
    %v90 = vld [vmem:[%s89] sm:$0x1]
    %91 = vrot.lane.b32.xlu0 %v90, 8
    %v92 = vpop.permute.xlu0 %91
    %vm93 = vcmask 130112
    %94 = vst.msk [vmem:[#allocation0] sm:$0x1] %vm93, %v92
    %s96 = sshll.u32 1, 1
    %s97 = ssub.s32 %s96, 1
    %v99 = vld [vmem:[#allocation0] sm:%s97]
    %s100 = sshll.u32 1, 1
    %s101 = ssub.s32 %s100, 1
    %102 = vst [vmem:[%s1] sm:%s101] %v99

// kernel: cnn_block_forward.1
$region0: #{cnn_block_forward.1}
  #allocation0 [shape = 'u32[]', space=smem, size = 0x4, offset = 0x4, fixed_abs, tag = 'smem constant byte address 0x4 - core index']
  #allocation1 [shape = 'u32[144,128]{1,0:T(1,128)}', space=vmem, size = 0x12000, scoped, tag = 'internal scratch']
  #allocation2 [shape = 'f32[6,18,64]{2,1,0:T(8,128)}', space=vmem, size = 0x12000, scoped, tag = 'scratch operand']
  %s0 = inlined_call_operand.vmem [shape: f32[6,16,64], index: 0, kind: input, shape index: {}]
  %s1 = inlined_call_operand.vmem [shape: bf16[3,64,128], index: 1, kind: input, shape index: {}]
  %s2 = inlined_call_operand.vmem [shape: bf16[64,128], index: 2, kind: input, shape index: {}]
  %s3 = inlined_call_operand.vmem [shape: f32[1,64], index: 3, kind: input, shape index: {}]
  %s4 = inlined_call_operand.vmem [shape: f32[1,64], index: 4, kind: input, shape index: {}]
  %s5 = inlined_call_operand.vmem [shape: f32[1,128], index: 5, kind: input, shape index: {}]
  %s6 = inlined_call_operand.vmem [shape: f32[1,128], index: 6, kind: input, shape index: {}]
  %s7 = inlined_call_operand.vmem [shape: f32[64,64], index: 7, kind: input, shape index: {}]
  %s8 = inlined_call_operand.vmem [shape: f32[128,128], index: 8, kind: input, shape index: {}]
  %s9 = inlined_call_operand.vmem [shape: f32[96,128], index: 9, kind: output, shape index: {}]
  %s10 = sld [smem:[#allocation0]]
  $region46: #{cnn_block_forward.1} parent=0
    _
  %s12 = ssub.s32 1, %s10
  %s13 = scalar_select 0, %s12, %s10
  // Predicated region
  $region2: #{cnn_block_forward.1} parent=0 // pred_check
    _
  $region3: #{cnn_block_forward.1} parent=0 // pred_check_branch
    %15 = sbr.rel (0) target = $region5
  $region4: #{cnn_block_forward.1} parent=0 // pred_region
    _
  $region5: #{cnn_block_forward.1} parent=0 // pred_fallthru
    _
  // Predicated region
  $region6: #{cnn_block_forward.1} parent=0 // pred_check
    _
  $region7: #{cnn_block_forward.1} parent=0 // pred_check_branch
    %17 = sbr.rel (0) target = $region9
  $region8: #{cnn_block_forward.1} parent=0 // pred_region
    _
  $region9: #{cnn_block_forward.1} parent=0 // pred_fallthru
    _
  // Predicated region
  $region10: #{cnn_block_forward.1} parent=0 // pred_check
    _
  $region11: #{cnn_block_forward.1} parent=0 // pred_check_branch
    %19 = sbr.rel (0) target = $region13
  $region12: #{cnn_block_forward.1} parent=0 // pred_region
    _
  $region13: #{cnn_block_forward.1} parent=0 // pred_fallthru
    _
  // Predicated region
  $region14: #{cnn_block_forward.1} parent=0 // pred_check
    _
  $region15: #{cnn_block_forward.1} parent=0 // pred_check_branch
    %21 = sbr.rel (0) target = $region17
  $region16: #{cnn_block_forward.1} parent=0 // pred_region
    _
  $region17: #{cnn_block_forward.1} parent=0 // pred_fallthru
    _
  // Predicated region
  $region18: #{cnn_block_forward.1} parent=0 // pred_check
    _
  $region19: #{cnn_block_forward.1} parent=0 // pred_check_branch
    %23 = sbr.rel (0) target = $region21
  $region20: #{cnn_block_forward.1} parent=0 // pred_region
    _
  $region21: #{cnn_block_forward.1} parent=0 // pred_fallthru
    _
  // Predicated region
  $region22: #{cnn_block_forward.1} parent=0 // pred_check
    _
  $region23: #{cnn_block_forward.1} parent=0 // pred_check_branch
    %25 = sbr.rel (0) target = $region25
  $region24: #{cnn_block_forward.1} parent=0 // pred_region
    _
  $region25: #{cnn_block_forward.1} parent=0 // pred_fallthru
    _
  // Predicated region
  $region26: #{cnn_block_forward.1} parent=0 // pred_check
    _
  $region27: #{cnn_block_forward.1} parent=0 // pred_check_branch
    %27 = sbr.rel (0) target = $region29
  $region28: #{cnn_block_forward.1} parent=0 // pred_region
    _
  $region29: #{cnn_block_forward.1} parent=0 // pred_fallthru
    _
  // Predicated region
  $region30: #{cnn_block_forward.1} parent=0 // pred_check
    _
  $region31: #{cnn_block_forward.1} parent=0 // pred_check_branch
    %29 = sbr.rel (0) target = $region33
  $region32: #{cnn_block_forward.1} parent=0 // pred_region
    _
  $region33: #{cnn_block_forward.1} parent=0 // pred_fallthru
    _
  // Predicated region
  $region34: #{cnn_block_forward.1} parent=0 // pred_check
    _
  $region35: #{cnn_block_forward.1} parent=0 // pred_check_branch
    %31 = sbr.rel (0) target = $region37
  $region36: #{cnn_block_forward.1} parent=0 // pred_region
    _
  $region37: #{cnn_block_forward.1} parent=0 // pred_fallthru
    _
  %v33 = vld [vmem:[%s0] sm:$0xff]
  %v34 = vld [vmem:[%s0 + $0x8] sm:$0xff]
  %v35 = vld [vmem:[%s0 + $0x10] sm:$0xff]
  %v36 = vld [vmem:[%s0 + $0x18] sm:$0xff]
  %v37 = vld [vmem:[%s0 + $0x20] sm:$0xff]
  %v38 = vld [vmem:[%s0 + $0x28] sm:$0xff]
  %v39 = vld [vmem:[%s0 + $0x30] sm:$0xff]
  %v40 = vld [vmem:[%s0 + $0x38] sm:$0xff]
  %v41 = vld [vmem:[%s0 + $0x40] sm:$0xff]
  %v42 = vld [vmem:[%s0 + $0x48] sm:$0xff]
  %v43 = vld [vmem:[%s0 + $0x50] sm:$0xff]
  %v44 = vld [vmem:[%s0 + $0x58] sm:$0xff]
  %vm45 = vcmask 523264
  %v46 = vsel %vm45, %v33, 0.0
  %v47 = vsel %vm45, %v34, 0.0
  %v48 = vadd.f32 %v46, %v47
  %v49 = vsel %vm45, %v35, 0.0
  %v50 = vadd.f32 %v48, %v49
  %v51 = vsel %vm45, %v36, 0.0
  %v52 = vadd.f32 %v50, %v51
  %v53 = vsel %vm45, %v37, 0.0
  %v54 = vadd.f32 %v52, %v53
  %v55 = vsel %vm45, %v38, 0.0
  %v56 = vadd.f32 %v54, %v55
  %v57 = vsel %vm45, %v39, 0.0
  %v58 = vadd.f32 %v56, %v57
  %v59 = vsel %vm45, %v40, 0.0
  %v60 = vadd.f32 %v58, %v59
  %v61 = vsel %vm45, %v41, 0.0
  %v62 = vadd.f32 %v60, %v61
  %v63 = vsel %vm45, %v42, 0.0
  %v64 = vadd.f32 %v62, %v63
  %v65 = vsel %vm45, %v43, 0.0
  %v66 = vadd.f32 %v64, %v65
  %v67 = vsel %vm45, %v44, 0.0
  %v68 = vadd.f32 %v66, %v67
  %v69 = vrot.slane %v68, 4
  %v70 = vadd.f32 %v68, %v69
  %v71 = vrot.slane %v70, 2
  %v72 = vadd.f32 %v70, %v71
  %v73 = vrot.slane %v72, 1
  %v74 = vadd.f32 %v72, %v73
  %v75 = vmul.f32 %v33, %v33
  %v76 = vmul.f32 %v34, %v34
  %v77 = vmul.f32 %v35, %v35
  %v78 = vmul.f32 %v36, %v36
  %v79 = vmul.f32 %v37, %v37
  %v80 = vmul.f32 %v38, %v38
  %v81 = vmul.f32 %v39, %v39
  %v82 = vmul.f32 %v40, %v40
  %v83 = vmul.f32 %v41, %v41
  %v84 = vmul.f32 %v42, %v42
  %v85 = vmul.f32 %v43, %v43
  %v86 = vmul.f32 %v44, %v44
  %v87 = vsel %vm45, %v75, 0.0
  %v88 = vsel %vm45, %v76, 0.0
  %v89 = vadd.f32 %v87, %v88
  %v90 = vsel %vm45, %v77, 0.0
  %v91 = vadd.f32 %v89, %v90
  %v92 = vsel %vm45, %v78, 0.0
  %v93 = vadd.f32 %v91, %v92
  %v94 = vsel %vm45, %v79, 0.0
  %v95 = vadd.f32 %v93, %v94
  %v96 = vsel %vm45, %v80, 0.0
  %v97 = vadd.f32 %v95, %v96
  %v98 = vsel %vm45, %v81, 0.0
  %v99 = vadd.f32 %v97, %v98
  %v100 = vsel %vm45, %v82, 0.0
  %v101 = vadd.f32 %v99, %v100
  %v102 = vsel %vm45, %v83, 0.0
  %v103 = vadd.f32 %v101, %v102
  %v104 = vsel %vm45, %v84, 0.0
  %v105 = vadd.f32 %v103, %v104
  %v106 = vsel %vm45, %v85, 0.0
  %v107 = vadd.f32 %v105, %v106
  %v108 = vsel %vm45, %v86, 0.0
  %v109 = vadd.f32 %v107, %v108
  %v110 = vrot.slane %v109, 4
  %v111 = vadd.f32 %v109, %v110
  %v112 = vrot.slane %v111, 2
  %v113 = vadd.f32 %v111, %v112
  %v114 = vrot.slane %v113, 1
  %v115 = vadd.f32 %v113, %v114
  %v116 = vld [vmem:[%s7] sm:$0xff]
  %v117 = vld [vmem:[%s7 + $0x8] sm:$0xff]
  %v118 = vld [vmem:[%s7 + $0x10] sm:$0xff]
  %v119 = vld [vmem:[%s7 + $0x18] sm:$0xff]
  %v120 = vld [vmem:[%s7 + $0x20] sm:$0xff]
  %v121 = vld [vmem:[%s7 + $0x28] sm:$0xff]
  %v122 = vld [vmem:[%s7 + $0x30] sm:$0xff]
  %v123 = vld [vmem:[%s7 + $0x38] sm:$0xff]
  %v125 = vsel %vm45, %v74, 0
  %127 = vmatprep.subr.mxu0 0.0
  %128 = vmatpush1.msra.mxu0 0.0
  %129 = vmatprep.subr.mxu0 0.0
  %130 = vmatpush1.msra.mxu0 0.0
  %131 = vmatprep.subr.mxu0 0.0
  %132 = vmatpush1.msra.mxu0 0.0
  %133 = vmatprep.subr.mxu0 0.0
  %134 = vmatpush1.msra.mxu0 0.0
  %135 = vmatprep.subr.mxu0 0.0
  %136 = vmatpush1.msra.mxu0 0.0
  %137 = vmatprep.subr.mxu0 0.0
  %138 = vmatpush1.msra.mxu0 0.0
  %139 = vmatprep.subr.mxu0 0.0
  %140 = vmatpush1.msra.mxu0 0.0
  %141 = vmatprep.subr.mxu0 0.0
  %142 = vmatpush1.msra.mxu0 0.0
  %143 = vmatprep.subr.mxu0 0.0
  %144 = vmatpush1.msra.mxu0 %v123
  %145 = vmatprep.subr.mxu0 0.0
  %146 = vmatpush1.msra.mxu0 %v122
  %147 = vmatprep.subr.mxu0 0.0
  %148 = vmatpush1.msra.mxu0 %v121
  %149 = vmatprep.subr.mxu0 0.0
  %150 = vmatpush1.msra.mxu0 %v120
  %151 = vmatprep.subr.mxu0 0.0
  %152 = vmatpush1.msra.mxu0 %v119
  %153 = vmatprep.subr.mxu0 0.0
  %154 = vmatpush1.msra.mxu0 %v118
  %155 = vmatprep.subr.mxu0 0.0
  %156 = vmatpush1.msra.mxu0 %v117
  %157 = vmatprep.subr.mxu0 0.0
  %158 = vmatpush1.msra.mxu0 %v116
  %159 = vmatprep.subr.mxu0 0.0
  %160 = vmatpush2.msra.mxu0 0.0
  %161 = vmatprep.subr.mxu0 0.0
  %162 = vmatpush2.msra.mxu0 0.0
  %163 = vmatprep.subr.mxu0 0.0
  %164 = vmatpush2.msra.mxu0 0.0
  %165 = vmatprep.subr.mxu0 0.0
  %166 = vmatpush2.msra.mxu0 0.0
  %167 = vmatprep.subr.mxu0 0.0
  %168 = vmatpush2.msra.mxu0 0.0
  %169 = vmatprep.subr.mxu0 0.0
  %170 = vmatpush2.msra.mxu0 0.0
  %171 = vmatprep.subr.mxu0 0.0
  %172 = vmatpush2.msra.mxu0 0.0
  %173 = vmatprep.subr.mxu0 0.0
  %174 = vmatpush2.msra.mxu0 0.0
  %175 = vmatprep.subr.mxu0 0.0
  %176 = vmatpush2.msra.mxu0 0.0
  %177 = vmatprep.subr.mxu0 0.0
  %178 = vmatpush2.msra.mxu0 0.0
  %179 = vmatprep.subr.mxu0 0.0
  %180 = vmatpush2.msra.mxu0 0.0
  %181 = vmatprep.subr.mxu0 0.0
  %182 = vmatpush2.msra.mxu0 0.0
  %183 = vmatprep.subr.mxu0 0.0
  %184 = vmatpush2.msra.mxu0 0.0
  %185 = vmatprep.subr.mxu0 0.0
  %186 = vmatpush2.msra.mxu0 0.0
  %187 = vmatprep.subr.mxu0 0.0
  %188 = vmatpush2.msra.mxu0 0.0
  %189 = vmatprep.subr.mxu0 0.0
  %190 = vmatpush2.msra.mxu0 0.0
  %191 = vmatprep.mubr.f32.mxu0 0.0
  %192 = vmatmul.mubr.f32.gmra.mxu0 %v125
  %v193 = vpop.f32.mrf.mxu0
  %v194 = vadd.f32 0.0, %v193
  %v195 = vpop.f32.mrf.mxu0
  %196 = vdwg.mxu0
  %v197 = vmul.f32 %v194, 0.0006510417
  %v199 = vsel %vm45, %v115, 0
  %201 = vmatprep.subr.mxu0 0.0
  %202 = vmatpush1.msra.mxu0 0.0
  %203 = vmatprep.subr.mxu0 0.0
  %204 = vmatpush1.msra.mxu0 0.0
  %205 = vmatprep.subr.mxu0 0.0
  %206 = vmatpush1.msra.mxu0 0.0
  %207 = vmatprep.subr.mxu0 0.0
  %208 = vmatpush1.msra.mxu0 0.0
  %209 = vmatprep.subr.mxu0 0.0
  %210 = vmatpush1.msra.mxu0 0.0
  %211 = vmatprep.subr.mxu0 0.0
  %212 = vmatpush1.msra.mxu0 0.0
  %213 = vmatprep.subr.mxu0 0.0
  %214 = vmatpush1.msra.mxu0 0.0
  %215 = vmatprep.subr.mxu0 0.0
  %216 = vmatpush1.msra.mxu0 0.0
  %217 = vmatprep.subr.mxu0 0.0
  %218 = vmatpush1.msra.mxu0 %v123
  %219 = vmatprep.subr.mxu0 0.0
  %220 = vmatpush1.msra.mxu0 %v122
  %221 = vmatprep.subr.mxu0 0.0
  %222 = vmatpush1.msra.mxu0 %v121
  %223 = vmatprep.subr.mxu0 0.0
  %224 = vmatpush1.msra.mxu0 %v120
  %225 = vmatprep.subr.mxu0 0.0
  %226 = vmatpush1.msra.mxu0 %v119
  %227 = vmatprep.subr.mxu0 0.0
  %228 = vmatpush1.msra.mxu0 %v118
  %229 = vmatprep.subr.mxu0 0.0
  %230 = vmatpush1.msra.mxu0 %v117
  %231 = vmatprep.subr.mxu0 0.0
  %232 = vmatpush1.msra.mxu0 %v116
  %233 = vmatprep.subr.mxu0 0.0
  %234 = vmatpush2.msra.mxu0 0.0
  %235 = vmatprep.subr.mxu0 0.0
  %236 = vmatpush2.msra.mxu0 0.0
  %237 = vmatprep.subr.mxu0 0.0
  %238 = vmatpush2.msra.mxu0 0.0
  %239 = vmatprep.subr.mxu0 0.0
  %240 = vmatpush2.msra.mxu0 0.0
  %241 = vmatprep.subr.mxu0 0.0
  %242 = vmatpush2.msra.mxu0 0.0
  %243 = vmatprep.subr.mxu0 0.0
  %244 = vmatpush2.msra.mxu0 0.0
  %245 = vmatprep.subr.mxu0 0.0
  %246 = vmatpush2.msra.mxu0 0.0
  %247 = vmatprep.subr.mxu0 0.0
  %248 = vmatpush2.msra.mxu0 0.0
  %249 = vmatprep.subr.mxu0 0.0
  %250 = vmatpush2.msra.mxu0 0.0
  %251 = vmatprep.subr.mxu0 0.0
  %252 = vmatpush2.msra.mxu0 0.0
  %253 = vmatprep.subr.mxu0 0.0
  %254 = vmatpush2.msra.mxu0 0.0
  %255 = vmatprep.subr.mxu0 0.0
  %256 = vmatpush2.msra.mxu0 0.0
  %257 = vmatprep.subr.mxu0 0.0
  %258 = vmatpush2.msra.mxu0 0.0
  %259 = vmatprep.subr.mxu0 0.0
  %260 = vmatpush2.msra.mxu0 0.0
  %261 = vmatprep.subr.mxu0 0.0
  %262 = vmatpush2.msra.mxu0 0.0
  %263 = vmatprep.subr.mxu0 0.0
  %264 = vmatpush2.msra.mxu0 0.0
  %265 = vmatprep.mubr.f32.mxu0 0.0
  %266 = vmatmul.mubr.f32.gmra.mxu0 %v199
  %v267 = vpop.f32.mrf.mxu0
  %v268 = vadd.f32 0.0, %v267
  %v269 = vpop.f32.mrf.mxu0
  %270 = vdwg.mxu0
  %v271 = vmul.f32 %v268, 0.0006510417
  %v272 = vmul.f32 %v197, %v197
  %v273 = vsub.f32 %v271, %v272
  %v274 = vadd.f32 %v273, 1e-05
  %v275 = vrsqrt.pop %v274
  %v276 = vld [vmem:[%s3] sm:$0x1]
  %v277 = vmul.f32 %v275, %v276
  %v278 = vld [vmem:[%s4] sm:$0x1]
  %v279 = vmul.f32 %v197, %v277
  %v280 = vsub.f32 %v278, %v279
  %v281 = vlaneseq
  %v282 = vshrl.u32 %v281, 7
  %v283 = vsub.s32 0, %v282
  %v284 = vrot.slane %v277, %v283
  %v285 = vmul.f32 %v33, %v284
  %v286 = vmul.f32 %v34, %v284
  %v287 = vmul.f32 %v35, %v284
  %v288 = vmul.f32 %v36, %v284
  %v289 = vmul.f32 %v37, %v284
  %v290 = vmul.f32 %v38, %v284
  %v291 = vmul.f32 %v39, %v284
  %v292 = vmul.f32 %v40, %v284
  %v293 = vmul.f32 %v41, %v284
  %v294 = vmul.f32 %v42, %v284
  %v295 = vmul.f32 %v43, %v284
  %v296 = vmul.f32 %v44, %v284
  %v298 = vlaneseq
  %v299 = vshrl.u32 %v298, 7
  %v300 = vsub.s32 0, %v299
  %v301 = vrot.slane %v280, %v300
  %v303 = vadd.f32 %v285, %v301
  %v304 = vadd.f32 %v286, %v301
  %v305 = vadd.f32 %v287, %v301
  %v306 = vadd.f32 %v288, %v301
  %v307 = vadd.f32 %v289, %v301
  %v308 = vadd.f32 %v290, %v301
  %v309 = vadd.f32 %v291, %v301
  %v310 = vadd.f32 %v292, %v301
  %v311 = vadd.f32 %v293, %v301
  %v312 = vadd.f32 %v294, %v301
  %v313 = vadd.f32 %v295, %v301
  %v314 = vadd.f32 %v296, %v301
  %v315 = vmax.f32 %v303, 0.0
  %v316 = vmax.f32 %v304, 0.0
  %v317 = vmax.f32 %v305, 0.0
  %v318 = vmax.f32 %v306, 0.0
  %v319 = vmax.f32 %v307, 0.0
  %v320 = vmax.f32 %v308, 0.0
  %v321 = vmax.f32 %v309, 0.0
  %v322 = vmax.f32 %v310, 0.0
  %v323 = vmax.f32 %v311, 0.0
  %v324 = vmax.f32 %v312, 0.0
  %v325 = vmax.f32 %v313, 0.0
  %v326 = vmax.f32 %v314, 0.0
  %327 = vst.msk [vmem:[#allocation2 + $0x1] sm:$0xff] %vm45, %v315
  %328 = vst.msk [vmem:[#allocation2 + $0x9] sm:$0xff] %vm45, %v316
  %329 = vst.msk [vmem:[#allocation2 + $0x19] sm:$0xff] %vm45, %v317
  %330 = vst.msk [vmem:[#allocation2 + $0x21] sm:$0xff] %vm45, %v318
  %331 = vst.msk [vmem:[#allocation2 + $0x31] sm:$0xff] %vm45, %v319
  %332 = vst.msk [vmem:[#allocation2 + $0x39] sm:$0xff] %vm45, %v320
  %333 = vst.msk [vmem:[#allocation2 + $0x49] sm:$0xff] %vm45, %v321
  %334 = vst.msk [vmem:[#allocation2 + $0x51] sm:$0xff] %vm45, %v322
  %335 = vst.msk [vmem:[#allocation2 + $0x61] sm:$0xff] %vm45, %v323
  %336 = vst.msk [vmem:[#allocation2 + $0x69] sm:$0xff] %vm45, %v324
  %337 = vst.msk [vmem:[#allocation2 + $0x79] sm:$0xff] %vm45, %v325
  %338 = vst.msk [vmem:[#allocation2 + $0x81] sm:$0xff] %vm45, %v326
  %vm339 = vcmask 516096
  %340 = vst.msk [vmem:[#allocation2] sm:$0x1] %vm339, 0.0
  %341 = vst.msk [vmem:[#allocation2 + $0x18] sm:$0x1] %vm339, 0.0
  %342 = vst.msk [vmem:[#allocation2 + $0x30] sm:$0x1] %vm339, 0.0
  %343 = vst.msk [vmem:[#allocation2 + $0x48] sm:$0x1] %vm339, 0.0
  %344 = vst.msk [vmem:[#allocation2 + $0x60] sm:$0x1] %vm339, 0.0
  %345 = vst.msk [vmem:[#allocation2 + $0x78] sm:$0x1] %vm339, 0.0
  %346 = vst.msk [vmem:[#allocation2 + $0x11] sm:$0x1] %vm339, 0.0
  %347 = vst.msk [vmem:[#allocation2 + $0x29] sm:$0x1] %vm339, 0.0
  %348 = vst.msk [vmem:[#allocation2 + $0x41] sm:$0x1] %vm339, 0.0
  %349 = vst.msk [vmem:[#allocation2 + $0x59] sm:$0x1] %vm339, 0.0
  %350 = vst.msk [vmem:[#allocation2 + $0x71] sm:$0x1] %vm339, 0.0
  %351 = vst.msk [vmem:[#allocation2 + $0x89] sm:$0x1] %vm339, 0.0
  %v352 = vld [vmem:[#allocation2] sm:$0xff]
  %v353 = vld [vmem:[#allocation2 + $0x8] sm:$0xff]
  %v354 = vld [vmem:[#allocation2 + $0x10] sm:$0x3]
  %v355 = vld [vmem:[#allocation2 + $0x18] sm:$0xff]
  %v356 = vld [vmem:[#allocation2 + $0x20] sm:$0xff]
  %v357 = vld [vmem:[#allocation2 + $0x28] sm:$0x3]
  %v358 = vld [vmem:[#allocation2 + $0x30] sm:$0xff]
  %v359 = vld [vmem:[#allocation2 + $0x38] sm:$0xff]
  %v360 = vld [vmem:[#allocation2 + $0x40] sm:$0x3]
  %v361 = vld [vmem:[#allocation2 + $0x48] sm:$0xff]
  %v362 = vld [vmem:[#allocation2 + $0x50] sm:$0xff]
  %v363 = vld [vmem:[#allocation2 + $0x58] sm:$0x3]
  %v364 = vld [vmem:[#allocation2 + $0x60] sm:$0xff]
  %v365 = vld [vmem:[#allocation2 + $0x68] sm:$0xff]
  %v366 = vld [vmem:[#allocation2 + $0x70] sm:$0x3]
  %v367 = vld [vmem:[#allocation2 + $0x78] sm:$0xff]
  %v368 = vld [vmem:[#allocation2 + $0x80] sm:$0xff]
  %v369 = vld [vmem:[#allocation2 + $0x88] sm:$0x3]
  %v370 = vpack.c.bf16 %v353, %v352
  %v371 = vpack.c.bf16 %v354, %v354
  %v372 = vpack.c.bf16 %v356, %v355
  %v373 = vpack.c.bf16 %v357, %v357
  %v374 = vpack.c.bf16 %v359, %v358
  %v375 = vpack.c.bf16 %v360, %v360
  %v376 = vpack.c.bf16 %v362, %v361
  %v377 = vpack.c.bf16 %v363, %v363
  %v378 = vpack.c.bf16 %v365, %v364
  %v379 = vpack.c.bf16 %v366, %v366
  %v380 = vpack.c.bf16 %v368, %v367
  %v381 = vpack.c.bf16 %v369, %v369
  %v382 = vld [vmem:[%s1] sm:$0xf]
  %v383 = vld [vmem:[%s1 + $0x4] sm:$0xf]
  %v384 = vld [vmem:[%s1 + $0x8] sm:$0xf]
  %v385 = vld [vmem:[%s1 + $0xc] sm:$0xf]
  %v386 = vld [vmem:[%s1 + $0x10] sm:$0xf]
  %v387 = vld [vmem:[%s1 + $0x14] sm:$0xf]
  %v388 = vld [vmem:[%s1 + $0x18] sm:$0xf]
  %v389 = vld [vmem:[%s1 + $0x1c] sm:$0xf]
  %vm390 = vsmask.f32 7424
  %v392 = vshrl.u32 %v370, 16
  %v394 = vshll.u32 %v370, 16
  %v396 = vrot.slane %v394, 1
  %v397 = vor.u32 %v392, %v396
  %v399 = vshll.u32 %v371, 16
  %v401 = vrot.slane %v399, 1
  %v402 = vsel %vm390, %v397, %v401
  %v404 = vshrl.u32 %v372, 16
  %v406 = vshll.u32 %v372, 16
  %v408 = vrot.slane %v406, 1
  %v409 = vor.u32 %v404, %v408
  %v411 = vshll.u32 %v373, 16
  %v413 = vrot.slane %v411, 1
  %v414 = vsel %vm390, %v409, %v413
  %v416 = vshrl.u32 %v374, 16
  %v418 = vshll.u32 %v374, 16
  %v420 = vrot.slane %v418, 1
  %v421 = vor.u32 %v416, %v420
  %v423 = vshll.u32 %v375, 16
  %v425 = vrot.slane %v423, 1
  %v426 = vsel %vm390, %v421, %v425
  %v428 = vshrl.u32 %v376, 16
  %v430 = vshll.u32 %v376, 16
  %v432 = vrot.slane %v430, 1
  %v433 = vor.u32 %v428, %v432
  %v435 = vshll.u32 %v377, 16
  %v437 = vrot.slane %v435, 1
  %v438 = vsel %vm390, %v433, %v437
  %v440 = vshrl.u32 %v378, 16
  %v442 = vshll.u32 %v378, 16
  %v444 = vrot.slane %v442, 1
  %v445 = vor.u32 %v440, %v444
  %v447 = vshll.u32 %v379, 16
  %v449 = vrot.slane %v447, 1
  %v450 = vsel %vm390, %v445, %v449
  %v452 = vshrl.u32 %v380, 16
  %v454 = vshll.u32 %v380, 16
  %v456 = vrot.slane %v454, 1
  %v457 = vor.u32 %v452, %v456
  %v459 = vshll.u32 %v381, 16
  %v461 = vrot.slane %v459, 1
  %v462 = vsel %vm390, %v457, %v461
  %s463 = scalar_lea.vmem %s1, 32
  %v464 = vld [vmem:[%s463] sm:$0xf]
  %v465 = vld [vmem:[%s463 + $0x4] sm:$0xf]
  %v466 = vld [vmem:[%s463 + $0x8] sm:$0xf]
  %v467 = vld [vmem:[%s463 + $0xc] sm:$0xf]
  %v468 = vld [vmem:[%s463 + $0x10] sm:$0xf]
  %v469 = vld [vmem:[%s463 + $0x14] sm:$0xf]
  %v470 = vld [vmem:[%s463 + $0x18] sm:$0xf]
  %v471 = vld [vmem:[%s463 + $0x1c] sm:$0xf]
  %v480 = vunpack.c.l.b16 %v464
  %v481 = vunpack.c.l.b16 %v465
  %v482 = vunpack.c.l.b16 %v466
  %v483 = vunpack.c.l.b16 %v467
  %v484 = vunpack.c.l.b16 %v468
  %v485 = vunpack.c.l.b16 %v469
  %v486 = vunpack.c.l.b16 %v470
  %v487 = vunpack.c.l.b16 %v471
  %v488 = vpack.c.b16 %v481, %v480
  %v489 = vpack.c.b16 %v483, %v482
  %v490 = vpack.c.b16 %v485, %v484
  %v491 = vpack.c.b16 %v487, %v486
  %v497 = vsel %vm45, %v402, 0
  %v500 = vsel %vm45, %v414, 0
  %v503 = vsel %vm45, %v426, 0
  %v506 = vsel %vm45, %v438, 0
  %v509 = vsel %vm45, %v450, 0
  %v512 = vsel %vm45, %v462, 0
  %514 = vmatprep.subr.bf16.mxu0 0
  %515 = vmatpush1.bf16.msra.mxu0 0
  %516 = vmatprep.subr.bf16.mxu0 0
  %517 = vmatpush1.bf16.msra.mxu0 0
  %518 = vmatprep.subr.bf16.mxu0 0
  %519 = vmatpush1.bf16.msra.mxu0 0
  %520 = vmatprep.subr.bf16.mxu0 0
  %521 = vmatpush1.bf16.msra.mxu0 0
  %522 = vmatprep.subr.bf16.mxu0 0
  %523 = vmatpush1.bf16.msra.mxu0 %v491
  %524 = vmatprep.subr.bf16.mxu0 0
  %525 = vmatpush1.bf16.msra.mxu0 %v490
  %526 = vmatprep.subr.bf16.mxu0 0
  %527 = vmatpush1.bf16.msra.mxu0 %v489
  %528 = vmatprep.subr.bf16.mxu0 0
  %529 = vmatpush1.bf16.msra.mxu0 %v488
  %530 = vmatprep.subr.bf16.mxu0 0
  %531 = vmatpush2.bf16.msra.mxu0 0
  %532 = vmatprep.subr.bf16.mxu0 0
  %533 = vmatpush2.bf16.msra.mxu0 0
  %534 = vmatprep.subr.bf16.mxu0 0
  %535 = vmatpush2.bf16.msra.mxu0 0
  %536 = vmatprep.subr.bf16.mxu0 0
  %537 = vmatpush2.bf16.msra.mxu0 0
  %538 = vmatprep.subr.bf16.mxu0 0
  %539 = vmatpush2.bf16.msra.mxu0 0
  %540 = vmatprep.subr.bf16.mxu0 0
  %541 = vmatpush2.bf16.msra.mxu0 0
  %542 = vmatprep.subr.bf16.mxu0 0
  %543 = vmatpush2.bf16.msra.mxu0 0
  %544 = vmatprep.subr.bf16.mxu0 0
  %545 = vmatpush2.bf16.msra.mxu0 0
  %546 = vmatprep.mubr.bf16.mxu0 0
  %547 = vmatmul.mubr.bf16.gmra.mxu0 %v497
  %v548 = vpop.f32.mrf.mxu0
  %v549 = vadd.f32 0.0, %v548
  %v550 = vpop.f32.mrf.mxu0
  %v551 = vpop.f32.mrf.mxu0
  %v552 = vadd.f32 0.0, %v551
  %v553 = vpop.f32.mrf.mxu0
  %554 = vmatprep.mubr.bf16.mxu0 0
  %555 = vmatmul.mubr.bf16.gmra.mxu0 %v500
  %v556 = vpop.f32.mrf.mxu0
  %v557 = vadd.f32 0.0, %v556
  %v558 = vpop.f32.mrf.mxu0
  %v559 = vpop.f32.mrf.mxu0
  %v560 = vadd.f32 0.0, %v559
  %v561 = vpop.f32.mrf.mxu0
  %562 = vmatprep.mubr.bf16.mxu0 0
  %563 = vmatmul.mubr.bf16.gmra.mxu0 %v503
  %v564 = vpop.f32.mrf.mxu0
  %v565 = vadd.f32 0.0, %v564
  %v566 = vpop.f32.mrf.mxu0
  %v567 = vpop.f32.mrf.mxu0
  %v568 = vadd.f32 0.0, %v567
  %v569 = vpop.f32.mrf.mxu0
  %570 = vmatprep.mubr.bf16.mxu0 0
  %571 = vmatmul.mubr.bf16.gmra.mxu0 %v506
  %v572 = vpop.f32.mrf.mxu0
  %v573 = vadd.f32 0.0, %v572
  %v574 = vpop.f32.mrf.mxu0
  %v575 = vpop.f32.mrf.mxu0
  %v576 = vadd.f32 0.0, %v575
  %v577 = vpop.f32.mrf.mxu0
  %578 = vmatprep.mubr.bf16.mxu0 0
  %579 = vmatmul.mubr.bf16.gmra.mxu0 %v509
  %v580 = vpop.f32.mrf.mxu0
  %v581 = vadd.f32 0.0, %v580
  %v582 = vpop.f32.mrf.mxu0
  %v583 = vpop.f32.mrf.mxu0
  %v584 = vadd.f32 0.0, %v583
  %v585 = vpop.f32.mrf.mxu0
  %586 = vmatprep.mubr.bf16.mxu0 0
  %587 = vmatmul.mubr.bf16.gmra.mxu0 %v512
  %v588 = vpop.f32.mrf.mxu0
  %v589 = vadd.f32 0.0, %v588
  %v590 = vpop.f32.mrf.mxu0
  %v591 = vpop.f32.mrf.mxu0
  %v592 = vadd.f32 0.0, %v591
  %v593 = vpop.f32.mrf.mxu0
  %594 = vdwg.mxu0
  %v603 = vunpack.c.l.b16 %v382
  %v604 = vunpack.c.l.b16 %v383
  %v605 = vunpack.c.l.b16 %v384
  %v606 = vunpack.c.l.b16 %v385
  %v607 = vunpack.c.l.b16 %v386
  %v608 = vunpack.c.l.b16 %v387
  %v609 = vunpack.c.l.b16 %v388
  %v610 = vunpack.c.l.b16 %v389
  %v611 = vpack.c.b16 %v604, %v603
  %v612 = vpack.c.b16 %v606, %v605
  %v613 = vpack.c.b16 %v608, %v607
  %v614 = vpack.c.b16 %v610, %v609
  %v619 = vsel %vm45, %v370, 0
  %v621 = vsel %vm45, %v372, 0
  %v623 = vsel %vm45, %v374, 0
  %v625 = vsel %vm45, %v376, 0
  %v627 = vsel %vm45, %v378, 0
  %v629 = vsel %vm45, %v380, 0
  %631 = vmatprep.subr.bf16.mxu0 0
  %632 = vmatpush1.bf16.msra.mxu0 0
  %633 = vmatprep.subr.bf16.mxu0 0
  %634 = vmatpush1.bf16.msra.mxu0 0
  %635 = vmatprep.subr.bf16.mxu0 0
  %636 = vmatpush1.bf16.msra.mxu0 0
  %637 = vmatprep.subr.bf16.mxu0 0
  %638 = vmatpush1.bf16.msra.mxu0 0
  %639 = vmatprep.subr.bf16.mxu0 0
  %640 = vmatpush1.bf16.msra.mxu0 %v614
  %641 = vmatprep.subr.bf16.mxu0 0
  %642 = vmatpush1.bf16.msra.mxu0 %v613
  %643 = vmatprep.subr.bf16.mxu0 0
  %644 = vmatpush1.bf16.msra.mxu0 %v612
  %645 = vmatprep.subr.bf16.mxu0 0
  %646 = vmatpush1.bf16.msra.mxu0 %v611
  %647 = vmatprep.subr.bf16.mxu0 0
  %648 = vmatpush2.bf16.msra.mxu0 0
  %649 = vmatprep.subr.bf16.mxu0 0
  %650 = vmatpush2.bf16.msra.mxu0 0
  %651 = vmatprep.subr.bf16.mxu0 0
  %652 = vmatpush2.bf16.msra.mxu0 0
  %653 = vmatprep.subr.bf16.mxu0 0
  %654 = vmatpush2.bf16.msra.mxu0 0
  %655 = vmatprep.subr.bf16.mxu0 0
  %656 = vmatpush2.bf16.msra.mxu0 0
  %657 = vmatprep.subr.bf16.mxu0 0
  %658 = vmatpush2.bf16.msra.mxu0 0
  %659 = vmatprep.subr.bf16.mxu0 0
  %660 = vmatpush2.bf16.msra.mxu0 0
  %661 = vmatprep.subr.bf16.mxu0 0
  %662 = vmatpush2.bf16.msra.mxu0 0
  %663 = vmatprep.mubr.bf16.mxu0 0
  %664 = vmatmul.mubr.bf16.gmra.mxu0 %v619
  %v665 = vpop.f32.mrf.mxu0
  %v666 = vadd.f32 %v549, %v665
  %v667 = vpop.f32.mrf.mxu0
  %v668 = vpop.f32.mrf.mxu0
  %v669 = vadd.f32 %v552, %v668
  %v670 = vpop.f32.mrf.mxu0
  %671 = vmatprep.mubr.bf16.mxu0 0
  %672 = vmatmul.mubr.bf16.gmra.mxu0 %v621
  %v673 = vpop.f32.mrf.mxu0
  %v674 = vadd.f32 %v557, %v673
  %v675 = vpop.f32.mrf.mxu0
  %v676 = vpop.f32.mrf.mxu0
  %v677 = vadd.f32 %v560, %v676
  %v678 = vpop.f32.mrf.mxu0
  %679 = vmatprep.mubr.bf16.mxu0 0
  %680 = vmatmul.mubr.bf16.gmra.mxu0 %v623
  %v681 = vpop.f32.mrf.mxu0
  %v682 = vadd.f32 %v565, %v681
  %v683 = vpop.f32.mrf.mxu0
  %v684 = vpop.f32.mrf.mxu0
  %v685 = vadd.f32 %v568, %v684
  %v686 = vpop.f32.mrf.mxu0
  %687 = vmatprep.mubr.bf16.mxu0 0
  %688 = vmatmul.mubr.bf16.gmra.mxu0 %v625
  %v689 = vpop.f32.mrf.mxu0
  %v690 = vadd.f32 %v573, %v689
  %v691 = vpop.f32.mrf.mxu0
  %v692 = vpop.f32.mrf.mxu0
  %v693 = vadd.f32 %v576, %v692
  %v694 = vpop.f32.mrf.mxu0
  %695 = vmatprep.mubr.bf16.mxu0 0
  %696 = vmatmul.mubr.bf16.gmra.mxu0 %v627
  %v697 = vpop.f32.mrf.mxu0
  %v698 = vadd.f32 %v581, %v697
  %v699 = vpop.f32.mrf.mxu0
  %v700 = vpop.f32.mrf.mxu0
  %v701 = vadd.f32 %v584, %v700
  %v702 = vpop.f32.mrf.mxu0
  %703 = vmatprep.mubr.bf16.mxu0 0
  %704 = vmatmul.mubr.bf16.gmra.mxu0 %v629
  %v705 = vpop.f32.mrf.mxu0
  %v706 = vadd.f32 %v589, %v705
  %v707 = vpop.f32.mrf.mxu0
  %v708 = vpop.f32.mrf.mxu0
  %v709 = vadd.f32 %v592, %v708
  %v710 = vpop.f32.mrf.mxu0
  %711 = vdwg.mxu0
  %vm724 = vcmask 1046528
  %v725 = vrot.slane %v370, 1
  %v726 = vrot.slane %v371, 1
  %v727 = vsel %vm724, %v725, %v726
  %v728 = vrot.slane %v372, 1
  %v729 = vrot.slane %v373, 1
  %v730 = vsel %vm724, %v728, %v729
  %v731 = vrot.slane %v374, 1
  %v732 = vrot.slane %v375, 1
  %v733 = vsel %vm724, %v731, %v732
  %v734 = vrot.slane %v376, 1
  %v735 = vrot.slane %v377, 1
  %v736 = vsel %vm724, %v734, %v735
  %v737 = vrot.slane %v378, 1
  %v738 = vrot.slane %v379, 1
  %v739 = vsel %vm724, %v737, %v738
  %v740 = vrot.slane %v380, 1
  %v741 = vrot.slane %v381, 1
  %v742 = vsel %vm724, %v740, %v741
  %s743 = scalar_lea.vmem %s1, 64
  %v744 = vld [vmem:[%s743] sm:$0xf]
  %v745 = vld [vmem:[%s743 + $0x4] sm:$0xf]
  %v746 = vld [vmem:[%s743 + $0x8] sm:$0xf]
  %v747 = vld [vmem:[%s743 + $0xc] sm:$0xf]
  %v748 = vld [vmem:[%s743 + $0x10] sm:$0xf]
  %v749 = vld [vmem:[%s743 + $0x14] sm:$0xf]
  %v750 = vld [vmem:[%s743 + $0x18] sm:$0xf]
  %v751 = vld [vmem:[%s743 + $0x1c] sm:$0xf]
  %v760 = vunpack.c.l.b16 %v744
  %v761 = vunpack.c.l.b16 %v745
  %v762 = vunpack.c.l.b16 %v746
  %v763 = vunpack.c.l.b16 %v747
  %v764 = vunpack.c.l.b16 %v748
  %v765 = vunpack.c.l.b16 %v749
  %v766 = vunpack.c.l.b16 %v750
  %v767 = vunpack.c.l.b16 %v751
  %v768 = vpack.c.b16 %v761, %v760
  %v769 = vpack.c.b16 %v763, %v762
  %v770 = vpack.c.b16 %v765, %v764
  %v771 = vpack.c.b16 %v767, %v766
  %v777 = vsel %vm45, %v727, 0
  %v780 = vsel %vm45, %v730, 0
  %v783 = vsel %vm45, %v733, 0
  %v786 = vsel %vm45, %v736, 0
  %v789 = vsel %vm45, %v739, 0
  %v792 = vsel %vm45, %v742, 0
  %794 = vmatprep.subr.bf16.mxu0 0
  %795 = vmatpush1.bf16.msra.mxu0 0
  %796 = vmatprep.subr.bf16.mxu0 0
  %797 = vmatpush1.bf16.msra.mxu0 0
  %798 = vmatprep.subr.bf16.mxu0 0
  %799 = vmatpush1.bf16.msra.mxu0 0
  %800 = vmatprep.subr.bf16.mxu0 0
  %801 = vmatpush1.bf16.msra.mxu0 0
  %802 = vmatprep.subr.bf16.mxu0 0
  %803 = vmatpush1.bf16.msra.mxu0 %v771
  %804 = vmatprep.subr.bf16.mxu0 0
  %805 = vmatpush1.bf16.msra.mxu0 %v770
  %806 = vmatprep.subr.bf16.mxu0 0
  %807 = vmatpush1.bf16.msra.mxu0 %v769
  %808 = vmatprep.subr.bf16.mxu0 0
  %809 = vmatpush1.bf16.msra.mxu0 %v768
  %810 = vmatprep.subr.bf16.mxu0 0
  %811 = vmatpush2.bf16.msra.mxu0 0
  %812 = vmatprep.subr.bf16.mxu0 0
  %813 = vmatpush2.bf16.msra.mxu0 0
  %814 = vmatprep.subr.bf16.mxu0 0
  %815 = vmatpush2.bf16.msra.mxu0 0
  %816 = vmatprep.subr.bf16.mxu0 0
  %817 = vmatpush2.bf16.msra.mxu0 0
  %818 = vmatprep.subr.bf16.mxu0 0
  %819 = vmatpush2.bf16.msra.mxu0 0
  %820 = vmatprep.subr.bf16.mxu0 0
  %821 = vmatpush2.bf16.msra.mxu0 0
  %822 = vmatprep.subr.bf16.mxu0 0
  %823 = vmatpush2.bf16.msra.mxu0 0
  %824 = vmatprep.subr.bf16.mxu0 0
  %825 = vmatpush2.bf16.msra.mxu0 0
  %826 = vmatprep.mubr.bf16.mxu0 0
  %827 = vmatmul.mubr.bf16.gmra.mxu0 %v777
  %v828 = vpop.f32.mrf.mxu0
  %v829 = vadd.f32 0.0, %v828
  %v830 = vpop.f32.mrf.mxu0
  %v831 = vpop.f32.mrf.mxu0
  %v832 = vadd.f32 0.0, %v831
  %v833 = vpop.f32.mrf.mxu0
  %834 = vmatprep.mubr.bf16.mxu0 0
  %835 = vmatmul.mubr.bf16.gmra.mxu0 %v780
  %v836 = vpop.f32.mrf.mxu0
  %v837 = vadd.f32 0.0, %v836
  %v838 = vpop.f32.mrf.mxu0
  %v839 = vpop.f32.mrf.mxu0
  %v840 = vadd.f32 0.0, %v839
  %v841 = vpop.f32.mrf.mxu0
  %842 = vmatprep.mubr.bf16.mxu0 0
  %843 = vmatmul.mubr.bf16.gmra.mxu0 %v783
  %v844 = vpop.f32.mrf.mxu0
  %v845 = vadd.f32 0.0, %v844
  %v846 = vpop.f32.mrf.mxu0
  %v847 = vpop.f32.mrf.mxu0
  %v848 = vadd.f32 0.0, %v847
  %v849 = vpop.f32.mrf.mxu0
  %850 = vmatprep.mubr.bf16.mxu0 0
  %851 = vmatmul.mubr.bf16.gmra.mxu0 %v786
  %v852 = vpop.f32.mrf.mxu0
  %v853 = vadd.f32 0.0, %v852
  %v854 = vpop.f32.mrf.mxu0
  %v855 = vpop.f32.mrf.mxu0
  %v856 = vadd.f32 0.0, %v855
  %v857 = vpop.f32.mrf.mxu0
  %858 = vmatprep.mubr.bf16.mxu0 0
  %859 = vmatmul.mubr.bf16.gmra.mxu0 %v789
  %v860 = vpop.f32.mrf.mxu0
  %v861 = vadd.f32 0.0, %v860
  %v862 = vpop.f32.mrf.mxu0
  %v863 = vpop.f32.mrf.mxu0
  %v864 = vadd.f32 0.0, %v863
  %v865 = vpop.f32.mrf.mxu0
  %866 = vmatprep.mubr.bf16.mxu0 0
  %867 = vmatmul.mubr.bf16.gmra.mxu0 %v792
  %v868 = vpop.f32.mrf.mxu0
  %v869 = vadd.f32 0.0, %v868
  %v870 = vpop.f32.mrf.mxu0
  %v871 = vpop.f32.mrf.mxu0
  %v872 = vadd.f32 0.0, %v871
  %v873 = vpop.f32.mrf.mxu0
  %874 = vdwg.mxu0
  %v875 = vadd.f32 %v666, %v829
  %v876 = vadd.f32 %v669, %v832
  %v877 = vadd.f32 %v674, %v837
  %v878 = vadd.f32 %v677, %v840
  %v879 = vadd.f32 %v682, %v845
  %v880 = vadd.f32 %v685, %v848
  %v881 = vadd.f32 %v690, %v853
  %v882 = vadd.f32 %v693, %v856
  %v883 = vadd.f32 %v698, %v861
  %v884 = vadd.f32 %v701, %v864
  %v885 = vadd.f32 %v706, %v869
  %v886 = vadd.f32 %v709, %v872
  %v887 = vpack.c.bf16 %v34, %v33
  %v888 = vpack.c.bf16 %v36, %v35
  %v889 = vpack.c.bf16 %v38, %v37
  %v890 = vpack.c.bf16 %v40, %v39
  %v891 = vpack.c.bf16 %v42, %v41
  %v892 = vpack.c.bf16 %v44, %v43
  %v893 = vld [vmem:[%s2] sm:$0xf]
  %v894 = vld [vmem:[%s2 + $0x4] sm:$0xf]
  %v895 = vld [vmem:[%s2 + $0x8] sm:$0xf]
  %v896 = vld [vmem:[%s2 + $0xc] sm:$0xf]
  %v897 = vld [vmem:[%s2 + $0x10] sm:$0xf]
  %v898 = vld [vmem:[%s2 + $0x14] sm:$0xf]
  %v899 = vld [vmem:[%s2 + $0x18] sm:$0xf]
  %v900 = vld [vmem:[%s2 + $0x1c] sm:$0xf]
  %v909 = vunpack.c.l.b16 %v893
  %v910 = vunpack.c.l.b16 %v894
  %v911 = vunpack.c.l.b16 %v895
  %v912 = vunpack.c.l.b16 %v896
  %v913 = vunpack.c.l.b16 %v897
  %v914 = vunpack.c.l.b16 %v898
  %v915 = vunpack.c.l.b16 %v899
  %v916 = vunpack.c.l.b16 %v900
  %v917 = vpack.c.b16 %v910, %v909
  %v918 = vpack.c.b16 %v912, %v911
  %v919 = vpack.c.b16 %v914, %v913
  %v920 = vpack.c.b16 %v916, %v915
  %v926 = vsel %vm45, %v887, 0
  %v929 = vsel %vm45, %v888, 0
  %v932 = vsel %vm45, %v889, 0
  %v935 = vsel %vm45, %v890, 0
  %v938 = vsel %vm45, %v891, 0
  %v941 = vsel %vm45, %v892, 0
  %943 = vmatprep.subr.bf16.mxu0 0
  %944 = vmatpush1.bf16.msra.mxu0 0
  %945 = vmatprep.subr.bf16.mxu0 0
  %946 = vmatpush1.bf16.msra.mxu0 0
  %947 = vmatprep.subr.bf16.mxu0 0
  %948 = vmatpush1.bf16.msra.mxu0 0
  %949 = vmatprep.subr.bf16.mxu0 0
  %950 = vmatpush1.bf16.msra.mxu0 0
  %951 = vmatprep.subr.bf16.mxu0 0
  %952 = vmatpush1.bf16.msra.mxu0 %v920
  %953 = vmatprep.subr.bf16.mxu0 0
  %954 = vmatpush1.bf16.msra.mxu0 %v919
  %955 = vmatprep.subr.bf16.mxu0 0
  %956 = vmatpush1.bf16.msra.mxu0 %v918
  %957 = vmatprep.subr.bf16.mxu0 0
  %958 = vmatpush1.bf16.msra.mxu0 %v917
  %959 = vmatprep.subr.bf16.mxu0 0
  %960 = vmatpush2.bf16.msra.mxu0 0
  %961 = vmatprep.subr.bf16.mxu0 0
  %962 = vmatpush2.bf16.msra.mxu0 0
  %963 = vmatprep.subr.bf16.mxu0 0
  %964 = vmatpush2.bf16.msra.mxu0 0
  %965 = vmatprep.subr.bf16.mxu0 0
  %966 = vmatpush2.bf16.msra.mxu0 0
  %967 = vmatprep.subr.bf16.mxu0 0
  %968 = vmatpush2.bf16.msra.mxu0 0
  %969 = vmatprep.subr.bf16.mxu0 0
  %970 = vmatpush2.bf16.msra.mxu0 0
  %971 = vmatprep.subr.bf16.mxu0 0
  %972 = vmatpush2.bf16.msra.mxu0 0
  %973 = vmatprep.subr.bf16.mxu0 0
  %974 = vmatpush2.bf16.msra.mxu0 0
  %975 = vmatprep.mubr.bf16.mxu0 0
  %976 = vmatmul.mubr.bf16.gmra.mxu0 %v926
  %v977 = vpop.f32.mrf.mxu0
  %v978 = vadd.f32 0.0, %v977
  %v979 = vpop.f32.mrf.mxu0
  %v980 = vpop.f32.mrf.mxu0
  %v981 = vadd.f32 0.0, %v980
  %v982 = vpop.f32.mrf.mxu0
  %983 = vmatprep.mubr.bf16.mxu0 0
  %984 = vmatmul.mubr.bf16.gmra.mxu0 %v929
  %v985 = vpop.f32.mrf.mxu0
  %v986 = vadd.f32 0.0, %v985
  %v987 = vpop.f32.mrf.mxu0
  %v988 = vpop.f32.mrf.mxu0
  %v989 = vadd.f32 0.0, %v988
  %v990 = vpop.f32.mrf.mxu0
  %991 = vmatprep.mubr.bf16.mxu0 0
  %992 = vmatmul.mubr.bf16.gmra.mxu0 %v932
  %v993 = vpop.f32.mrf.mxu0
  %v994 = vadd.f32 0.0, %v993
  %v995 = vpop.f32.mrf.mxu0
  %v996 = vpop.f32.mrf.mxu0
  %v997 = vadd.f32 0.0, %v996
  %v998 = vpop.f32.mrf.mxu0
  %999 = vmatprep.mubr.bf16.mxu0 0
  %1000 = vmatmul.mubr.bf16.gmra.mxu0 %v935
  %v1001 = vpop.f32.mrf.mxu0
  %v1002 = vadd.f32 0.0, %v1001
  %v1003 = vpop.f32.mrf.mxu0
  %v1004 = vpop.f32.mrf.mxu0
  %v1005 = vadd.f32 0.0, %v1004
  %v1006 = vpop.f32.mrf.mxu0
  %1007 = vmatprep.mubr.bf16.mxu0 0
  %1008 = vmatmul.mubr.bf16.gmra.mxu0 %v938
  %v1009 = vpop.f32.mrf.mxu0
  %v1010 = vadd.f32 0.0, %v1009
  %v1011 = vpop.f32.mrf.mxu0
  %v1012 = vpop.f32.mrf.mxu0
  %v1013 = vadd.f32 0.0, %v1012
  %v1014 = vpop.f32.mrf.mxu0
  %1015 = vmatprep.mubr.bf16.mxu0 0
  %1016 = vmatmul.mubr.bf16.gmra.mxu0 %v941
  %v1017 = vpop.f32.mrf.mxu0
  %v1018 = vadd.f32 0.0, %v1017
  %v1019 = vpop.f32.mrf.mxu0
  %v1020 = vpop.f32.mrf.mxu0
  %v1021 = vadd.f32 0.0, %v1020
  %v1022 = vpop.f32.mrf.mxu0
  %1023 = vdwg.mxu0
  %v1024 = vld [vmem:[%s8] sm:$0xff]
  %v1025 = vld [vmem:[%s8 + $0x8] sm:$0xff]
  %v1026 = vld [vmem:[%s8 + $0x10] sm:$0xff]
  %v1027 = vld [vmem:[%s8 + $0x18] sm:$0xff]
  %v1028 = vld [vmem:[%s8 + $0x20] sm:$0xff]
  %v1029 = vld [vmem:[%s8 + $0x28] sm:$0xff]
  %v1030 = vld [vmem:[%s8 + $0x30] sm:$0xff]
  %v1031 = vld [vmem:[%s8 + $0x38] sm:$0xff]
  %v1032 = vld [vmem:[%s8 + $0x40] sm:$0xff]
  %v1033 = vld [vmem:[%s8 + $0x48] sm:$0xff]
  %v1034 = vld [vmem:[%s8 + $0x50] sm:$0xff]
  %v1035 = vld [vmem:[%s8 + $0x58] sm:$0xff]
  %v1036 = vld [vmem:[%s8 + $0x60] sm:$0xff]
  %v1037 = vld [vmem:[%s8 + $0x68] sm:$0xff]
  %v1038 = vld [vmem:[%s8 + $0x70] sm:$0xff]
  %v1039 = vld [vmem:[%s8 + $0x78] sm:$0xff]
  %v1040 = vld [vmem:[%s5] sm:$0x1]
  %v1041 = vld [vmem:[%s6] sm:$0x1]
  %v1042 = vadd.f32 %v875, %v876
  %v1043 = vadd.f32 %v1042, %v877
  %v1044 = vadd.f32 %v1043, %v878
  %v1045 = vadd.f32 %v1044, %v879
  %v1046 = vadd.f32 %v1045, %v880
  %v1047 = vadd.f32 %v1046, %v881
  %v1048 = vadd.f32 %v1047, %v882
  %v1049 = vadd.f32 %v1048, %v883
  %v1050 = vadd.f32 %v1049, %v884
  %v1051 = vadd.f32 %v1050, %v885
  %v1052 = vadd.f32 %v1051, %v886
  %v1053 = vrot.slane %v1052, 4
  %v1054 = vadd.f32 %v1052, %v1053
  %v1055 = vrot.slane %v1054, 2
  %v1056 = vadd.f32 %v1054, %v1055
  %v1057 = vrot.slane %v1056, 1
  %v1058 = vadd.f32 %v1056, %v1057
  %v1059 = vmul.f32 %v875, %v875
  %v1060 = vmul.f32 %v876, %v876
  %v1061 = vmul.f32 %v877, %v877
  %v1062 = vmul.f32 %v878, %v878
  %v1063 = vmul.f32 %v879, %v879
  %v1064 = vmul.f32 %v880, %v880
  %v1065 = vmul.f32 %v881, %v881
  %v1066 = vmul.f32 %v882, %v882
  %v1067 = vmul.f32 %v883, %v883
  %v1068 = vmul.f32 %v884, %v884
  %v1069 = vmul.f32 %v885, %v885
  %v1070 = vmul.f32 %v886, %v886
  %v1071 = vadd.f32 %v1059, %v1060
  %v1072 = vadd.f32 %v1071, %v1061
  %v1073 = vadd.f32 %v1072, %v1062
  %v1074 = vadd.f32 %v1073, %v1063
  %v1075 = vadd.f32 %v1074, %v1064
  %v1076 = vadd.f32 %v1075, %v1065
  %v1077 = vadd.f32 %v1076, %v1066
  %v1078 = vadd.f32 %v1077, %v1067
  %v1079 = vadd.f32 %v1078, %v1068
  %v1080 = vadd.f32 %v1079, %v1069
  %v1081 = vadd.f32 %v1080, %v1070
  %v1082 = vrot.slane %v1081, 4
  %v1083 = vadd.f32 %v1081, %v1082
  %v1084 = vrot.slane %v1083, 2
  %v1085 = vadd.f32 %v1083, %v1084
  %v1086 = vrot.slane %v1085, 1
  %v1087 = vadd.f32 %v1085, %v1086
  %1088 = vmatprep.subr.mxu0 0.0
  %1089 = vmatpush1.msra.mxu0 %v1039
  %1090 = vmatprep.subr.mxu0 0.0
  %1091 = vmatpush1.msra.mxu0 %v1038
  %1092 = vmatprep.subr.mxu0 0.0
  %1093 = vmatpush1.msra.mxu0 %v1037
  %1094 = vmatprep.subr.mxu0 0.0
  %1095 = vmatpush1.msra.mxu0 %v1036
  %1096 = vmatprep.subr.mxu0 0.0
  %1097 = vmatpush1.msra.mxu0 %v1035
  %1098 = vmatprep.subr.mxu0 0.0
  %1099 = vmatpush1.msra.mxu0 %v1034
  %1100 = vmatprep.subr.mxu0 0.0
  %1101 = vmatpush1.msra.mxu0 %v1033
  %1102 = vmatprep.subr.mxu0 0.0
  %1103 = vmatpush1.msra.mxu0 %v1032
  %1104 = vmatprep.subr.mxu0 0.0
  %1105 = vmatpush1.msra.mxu0 %v1031
  %1106 = vmatprep.subr.mxu0 0.0
  %1107 = vmatpush1.msra.mxu0 %v1030
  %1108 = vmatprep.subr.mxu0 0.0
  %1109 = vmatpush1.msra.mxu0 %v1029
  %1110 = vmatprep.subr.mxu0 0.0
  %1111 = vmatpush1.msra.mxu0 %v1028
  %1112 = vmatprep.subr.mxu0 0.0
  %1113 = vmatpush1.msra.mxu0 %v1027
  %1114 = vmatprep.subr.mxu0 0.0
  %1115 = vmatpush1.msra.mxu0 %v1026
  %1116 = vmatprep.subr.mxu0 0.0
  %1117 = vmatpush1.msra.mxu0 %v1025
  %1118 = vmatprep.subr.mxu0 0.0
  %1119 = vmatpush1.msra.mxu0 %v1024
  %1120 = vmatprep.subr.mxu0 0.0
  %1121 = vmatpush2.msra.mxu0 0.0
  %1122 = vmatprep.subr.mxu0 0.0
  %1123 = vmatpush2.msra.mxu0 0.0
  %1124 = vmatprep.subr.mxu0 0.0
  %1125 = vmatpush2.msra.mxu0 0.0
  %1126 = vmatprep.subr.mxu0 0.0
  %1127 = vmatpush2.msra.mxu0 0.0
  %1128 = vmatprep.subr.mxu0 0.0
  %1129 = vmatpush2.msra.mxu0 0.0
  %1130 = vmatprep.subr.mxu0 0.0
  %1131 = vmatpush2.msra.mxu0 0.0
  %1132 = vmatprep.subr.mxu0 0.0
  %1133 = vmatpush2.msra.mxu0 0.0
  %1134 = vmatprep.subr.mxu0 0.0
  %1135 = vmatpush2.msra.mxu0 0.0
  %1136 = vmatprep.subr.mxu0 0.0
  %1137 = vmatpush2.msra.mxu0 0.0
  %1138 = vmatprep.subr.mxu0 0.0
  %1139 = vmatpush2.msra.mxu0 0.0
  %1140 = vmatprep.subr.mxu0 0.0
  %1141 = vmatpush2.msra.mxu0 0.0
  %1142 = vmatprep.subr.mxu0 0.0
  %1143 = vmatpush2.msra.mxu0 0.0
  %1144 = vmatprep.subr.mxu0 0.0
  %1145 = vmatpush2.msra.mxu0 0.0
  %1146 = vmatprep.subr.mxu0 0.0
  %1147 = vmatpush2.msra.mxu0 0.0
  %1148 = vmatprep.subr.mxu0 0.0
  %1149 = vmatpush2.msra.mxu0 0.0
  %1150 = vmatprep.subr.mxu0 0.0
  %1151 = vmatpush2.msra.mxu0 0.0
  %1152 = vmatprep.mubr.f32.mxu0 0.0
  %1153 = vmatmul.mubr.f32.gmra.mxu0 %v1058
  %v1154 = vpop.f32.mrf.mxu0
  %v1155 = vadd.f32 0.0, %v1154
  %v1156 = vpop.f32.mrf.mxu0
  %1157 = vdwg.mxu0
  %v1158 = vmul.f32 %v1155, 0.0006510417
  %1159 = vmatprep.subr.mxu0 0.0
  %1160 = vmatpush1.msra.mxu0 %v1039
  %1161 = vmatprep.subr.mxu0 0.0
  %1162 = vmatpush1.msra.mxu0 %v1038
  %1163 = vmatprep.subr.mxu0 0.0
  %1164 = vmatpush1.msra.mxu0 %v1037
  %1165 = vmatprep.subr.mxu0 0.0
  %1166 = vmatpush1.msra.mxu0 %v1036
  %1167 = vmatprep.subr.mxu0 0.0
  %1168 = vmatpush1.msra.mxu0 %v1035
  %1169 = vmatprep.subr.mxu0 0.0
  %1170 = vmatpush1.msra.mxu0 %v1034
  %1171 = vmatprep.subr.mxu0 0.0
  %1172 = vmatpush1.msra.mxu0 %v1033
  %1173 = vmatprep.subr.mxu0 0.0
  %1174 = vmatpush1.msra.mxu0 %v1032
  %1175 = vmatprep.subr.mxu0 0.0
  %1176 = vmatpush1.msra.mxu0 %v1031
  %1177 = vmatprep.subr.mxu0 0.0
  %1178 = vmatpush1.msra.mxu0 %v1030
  %1179 = vmatprep.subr.mxu0 0.0
  %1180 = vmatpush1.msra.mxu0 %v1029
  %1181 = vmatprep.subr.mxu0 0.0
  %1182 = vmatpush1.msra.mxu0 %v1028
  %1183 = vmatprep.subr.mxu0 0.0
  %1184 = vmatpush1.msra.mxu0 %v1027
  %1185 = vmatprep.subr.mxu0 0.0
  %1186 = vmatpush1.msra.mxu0 %v1026
  %1187 = vmatprep.subr.mxu0 0.0
  %1188 = vmatpush1.msra.mxu0 %v1025
  %1189 = vmatprep.subr.mxu0 0.0
  %1190 = vmatpush1.msra.mxu0 %v1024
  %1191 = vmatprep.subr.mxu0 0.0
  %1192 = vmatpush2.msra.mxu0 0.0
  %1193 = vmatprep.subr.mxu0 0.0
  %1194 = vmatpush2.msra.mxu0 0.0
  %1195 = vmatprep.subr.mxu0 0.0
  %1196 = vmatpush2.msra.mxu0 0.0
  %1197 = vmatprep.subr.mxu0 0.0
  %1198 = vmatpush2.msra.mxu0 0.0
  %1199 = vmatprep.subr.mxu0 0.0
  %1200 = vmatpush2.msra.mxu0 0.0
  %1201 = vmatprep.subr.mxu0 0.0
  %1202 = vmatpush2.msra.mxu0 0.0
  %1203 = vmatprep.subr.mxu0 0.0
  %1204 = vmatpush2.msra.mxu0 0.0
  %1205 = vmatprep.subr.mxu0 0.0
  %1206 = vmatpush2.msra.mxu0 0.0
  %1207 = vmatprep.subr.mxu0 0.0
  %1208 = vmatpush2.msra.mxu0 0.0
  %1209 = vmatprep.subr.mxu0 0.0
  %1210 = vmatpush2.msra.mxu0 0.0
  %1211 = vmatprep.subr.mxu0 0.0
  %1212 = vmatpush2.msra.mxu0 0.0
  %1213 = vmatprep.subr.mxu0 0.0
  %1214 = vmatpush2.msra.mxu0 0.0
  %1215 = vmatprep.subr.mxu0 0.0
  %1216 = vmatpush2.msra.mxu0 0.0
  %1217 = vmatprep.subr.mxu0 0.0
  %1218 = vmatpush2.msra.mxu0 0.0
  %1219 = vmatprep.subr.mxu0 0.0
  %1220 = vmatpush2.msra.mxu0 0.0
  %1221 = vmatprep.subr.mxu0 0.0
  %1222 = vmatpush2.msra.mxu0 0.0
  %1223 = vmatprep.mubr.f32.mxu0 0.0
  %1224 = vmatmul.mubr.f32.gmra.mxu0 %v1087
  %v1225 = vpop.f32.mrf.mxu0
  %v1226 = vadd.f32 0.0, %v1225
  %v1227 = vpop.f32.mrf.mxu0
  %1228 = vdwg.mxu0
  %v1229 = vmul.f32 %v1226, 0.0006510417
  %v1230 = vmul.f32 %v1158, %v1158
  %v1231 = vsub.f32 %v1229, %v1230
  %v1232 = vadd.f32 %v1231, 1e-05
  %v1233 = vrsqrt.pop %v1232
  %v1234 = vmul.f32 %v1233, %v1040
  %v1235 = vlaneseq
  %v1236 = vshrl.u32 %v1235, 7
  %v1237 = vsub.s32 0, %v1236
  %v1238 = vrot.slane %v1234, %v1237
  %v1239 = vmul.f32 %v875, %v1238
  %v1240 = vmul.f32 %v876, %v1238
  %v1241 = vmul.f32 %v877, %v1238
  %v1242 = vmul.f32 %v878, %v1238
  %v1243 = vmul.f32 %v879, %v1238
  %v1244 = vmul.f32 %v880, %v1238
  %v1245 = vmul.f32 %v881, %v1238
  %v1246 = vmul.f32 %v882, %v1238
  %v1247 = vmul.f32 %v883, %v1238
  %v1248 = vmul.f32 %v884, %v1238
  %v1249 = vmul.f32 %v885, %v1238
  %v1250 = vmul.f32 %v886, %v1238
  %v1251 = vmul.f32 %v1158, %v1234
  %v1252 = vsub.f32 %v1041, %v1251
  %v1254 = vlaneseq
  %v1255 = vshrl.u32 %v1254, 7
  %v1256 = vsub.s32 0, %v1255
  %v1257 = vrot.slane %v1252, %v1256
  %v1259 = vadd.f32 %v1239, %v1257
  %v1260 = vadd.f32 %v1240, %v1257
  %v1261 = vadd.f32 %v1241, %v1257
  %v1262 = vadd.f32 %v1242, %v1257
  %v1263 = vadd.f32 %v1243, %v1257
  %v1264 = vadd.f32 %v1244, %v1257
  %v1265 = vadd.f32 %v1245, %v1257
  %v1266 = vadd.f32 %v1246, %v1257
  %v1267 = vadd.f32 %v1247, %v1257
  %v1268 = vadd.f32 %v1248, %v1257
  %v1269 = vadd.f32 %v1249, %v1257
  %v1270 = vadd.f32 %v1250, %v1257
  %v1271 = vadd.f32 %v978, %v981
  %v1272 = vadd.f32 %v1271, %v986
  %v1273 = vadd.f32 %v1272, %v989
  %v1274 = vadd.f32 %v1273, %v994
  %v1275 = vadd.f32 %v1274, %v997
  %v1276 = vadd.f32 %v1275, %v1002
  %v1277 = vadd.f32 %v1276, %v1005
  %v1278 = vadd.f32 %v1277, %v1010
  %v1279 = vadd.f32 %v1278, %v1013
  %v1280 = vadd.f32 %v1279, %v1018
  %v1281 = vadd.f32 %v1280, %v1021
  %v1282 = vrot.slane %v1281, 4
  %v1283 = vadd.f32 %v1281, %v1282
  %v1284 = vrot.slane %v1283, 2
  %v1285 = vadd.f32 %v1283, %v1284
  %v1286 = vrot.slane %v1285, 1
  %v1287 = vadd.f32 %v1285, %v1286
  %v1288 = vmul.f32 %v978, %v978
  %v1289 = vmul.f32 %v981, %v981
  %v1290 = vmul.f32 %v986, %v986
  %v1291 = vmul.f32 %v989, %v989
  %v1292 = vmul.f32 %v994, %v994
  %v1293 = vmul.f32 %v997, %v997
  %v1294 = vmul.f32 %v1002, %v1002
  %v1295 = vmul.f32 %v1005, %v1005
  %v1296 = vmul.f32 %v1010, %v1010
  %v1297 = vmul.f32 %v1013, %v1013
  %v1298 = vmul.f32 %v1018, %v1018
  %v1299 = vmul.f32 %v1021, %v1021
  %v1300 = vadd.f32 %v1288, %v1289
  %v1301 = vadd.f32 %v1300, %v1290
  %v1302 = vadd.f32 %v1301, %v1291
  %v1303 = vadd.f32 %v1302, %v1292
  %v1304 = vadd.f32 %v1303, %v1293
  %v1305 = vadd.f32 %v1304, %v1294
  %v1306 = vadd.f32 %v1305, %v1295
  %v1307 = vadd.f32 %v1306, %v1296
  %v1308 = vadd.f32 %v1307, %v1297
  %v1309 = vadd.f32 %v1308, %v1298
  %v1310 = vadd.f32 %v1309, %v1299
  %v1311 = vrot.slane %v1310, 4
  %v1312 = vadd.f32 %v1310, %v1311
  %v1313 = vrot.slane %v1312, 2
  %v1314 = vadd.f32 %v1312, %v1313
  %v1315 = vrot.slane %v1314, 1
  %v1316 = vadd.f32 %v1314, %v1315
  %1317 = vmatprep.subr.mxu0 0.0
  %1318 = vmatpush1.msra.mxu0 %v1039
  %1319 = vmatprep.subr.mxu0 0.0
  %1320 = vmatpush1.msra.mxu0 %v1038
  %1321 = vmatprep.subr.mxu0 0.0
  %1322 = vmatpush1.msra.mxu0 %v1037
  %1323 = vmatprep.subr.mxu0 0.0
  %1324 = vmatpush1.msra.mxu0 %v1036
  %1325 = vmatprep.subr.mxu0 0.0
  %1326 = vmatpush1.msra.mxu0 %v1035
  %1327 = vmatprep.subr.mxu0 0.0
  %1328 = vmatpush1.msra.mxu0 %v1034
  %1329 = vmatprep.subr.mxu0 0.0
  %1330 = vmatpush1.msra.mxu0 %v1033
  %1331 = vmatprep.subr.mxu0 0.0
  %1332 = vmatpush1.msra.mxu0 %v1032
  %1333 = vmatprep.subr.mxu0 0.0
  %1334 = vmatpush1.msra.mxu0 %v1031
  %1335 = vmatprep.subr.mxu0 0.0
  %1336 = vmatpush1.msra.mxu0 %v1030
  %1337 = vmatprep.subr.mxu0 0.0
  %1338 = vmatpush1.msra.mxu0 %v1029
  %1339 = vmatprep.subr.mxu0 0.0
  %1340 = vmatpush1.msra.mxu0 %v1028
  %1341 = vmatprep.subr.mxu0 0.0
  %1342 = vmatpush1.msra.mxu0 %v1027
  %1343 = vmatprep.subr.mxu0 0.0
  %1344 = vmatpush1.msra.mxu0 %v1026
  %1345 = vmatprep.subr.mxu0 0.0
  %1346 = vmatpush1.msra.mxu0 %v1025
  %1347 = vmatprep.subr.mxu0 0.0
  %1348 = vmatpush1.msra.mxu0 %v1024
  %1349 = vmatprep.subr.mxu0 0.0
  %1350 = vmatpush2.msra.mxu0 0.0
  %1351 = vmatprep.subr.mxu0 0.0
  %1352 = vmatpush2.msra.mxu0 0.0
  %1353 = vmatprep.subr.mxu0 0.0
  %1354 = vmatpush2.msra.mxu0 0.0
  %1355 = vmatprep.subr.mxu0 0.0
  %1356 = vmatpush2.msra.mxu0 0.0
  %1357 = vmatprep.subr.mxu0 0.0
  %1358 = vmatpush2.msra.mxu0 0.0
  %1359 = vmatprep.subr.mxu0 0.0
  %1360 = vmatpush2.msra.mxu0 0.0
  %1361 = vmatprep.subr.mxu0 0.0
  %1362 = vmatpush2.msra.mxu0 0.0
  %1363 = vmatprep.subr.mxu0 0.0
  %1364 = vmatpush2.msra.mxu0 0.0
  %1365 = vmatprep.subr.mxu0 0.0
  %1366 = vmatpush2.msra.mxu0 0.0
  %1367 = vmatprep.subr.mxu0 0.0
  %1368 = vmatpush2.msra.mxu0 0.0
  %1369 = vmatprep.subr.mxu0 0.0
  %1370 = vmatpush2.msra.mxu0 0.0
  %1371 = vmatprep.subr.mxu0 0.0
  %1372 = vmatpush2.msra.mxu0 0.0
  %1373 = vmatprep.subr.mxu0 0.0
  %1374 = vmatpush2.msra.mxu0 0.0
  %1375 = vmatprep.subr.mxu0 0.0
  %1376 = vmatpush2.msra.mxu0 0.0
  %1377 = vmatprep.subr.mxu0 0.0
  %1378 = vmatpush2.msra.mxu0 0.0
  %1379 = vmatprep.subr.mxu0 0.0
  %1380 = vmatpush2.msra.mxu0 0.0
  %1381 = vmatprep.mubr.f32.mxu0 0.0
  %1382 = vmatmul.mubr.f32.gmra.mxu0 %v1287
  %v1383 = vpop.f32.mrf.mxu0
  %v1384 = vadd.f32 0.0, %v1383
  %v1385 = vpop.f32.mrf.mxu0
  %1386 = vdwg.mxu0
  %v1387 = vmul.f32 %v1384, 0.0006510417
  %1388 = vmatprep.subr.mxu0 0.0
  %1389 = vmatpush1.msra.mxu0 %v1039
  %1390 = vmatprep.subr.mxu0 0.0
  %1391 = vmatpush1.msra.mxu0 %v1038
  %1392 = vmatprep.subr.mxu0 0.0
  %1393 = vmatpush1.msra.mxu0 %v1037
  %1394 = vmatprep.subr.mxu0 0.0
  %1395 = vmatpush1.msra.mxu0 %v1036
  %1396 = vmatprep.subr.mxu0 0.0
  %1397 = vmatpush1.msra.mxu0 %v1035
  %1398 = vmatprep.subr.mxu0 0.0
  %1399 = vmatpush1.msra.mxu0 %v1034
  %1400 = vmatprep.subr.mxu0 0.0
  %1401 = vmatpush1.msra.mxu0 %v1033
  %1402 = vmatprep.subr.mxu0 0.0
  %1403 = vmatpush1.msra.mxu0 %v1032
  %1404 = vmatprep.subr.mxu0 0.0
  %1405 = vmatpush1.msra.mxu0 %v1031
  %1406 = vmatprep.subr.mxu0 0.0
  %1407 = vmatpush1.msra.mxu0 %v1030
  %1408 = vmatprep.subr.mxu0 0.0
  %1409 = vmatpush1.msra.mxu0 %v1029
  %1410 = vmatprep.subr.mxu0 0.0
  %1411 = vmatpush1.msra.mxu0 %v1028
  %1412 = vmatprep.subr.mxu0 0.0
  %1413 = vmatpush1.msra.mxu0 %v1027
  %1414 = vmatprep.subr.mxu0 0.0
  %1415 = vmatpush1.msra.mxu0 %v1026
  %1416 = vmatprep.subr.mxu0 0.0
  %1417 = vmatpush1.msra.mxu0 %v1025
  %1418 = vmatprep.subr.mxu0 0.0
  %1419 = vmatpush1.msra.mxu0 %v1024
  %1420 = vmatprep.subr.mxu0 0.0
  %1421 = vmatpush2.msra.mxu0 0.0
  %1422 = vmatprep.subr.mxu0 0.0
  %1423 = vmatpush2.msra.mxu0 0.0
  %1424 = vmatprep.subr.mxu0 0.0
  %1425 = vmatpush2.msra.mxu0 0.0
  %1426 = vmatprep.subr.mxu0 0.0
  %1427 = vmatpush2.msra.mxu0 0.0
  %1428 = vmatprep.subr.mxu0 0.0
  %1429 = vmatpush2.msra.mxu0 0.0
  %1430 = vmatprep.subr.mxu0 0.0
  %1431 = vmatpush2.msra.mxu0 0.0
  %1432 = vmatprep.subr.mxu0 0.0
  %1433 = vmatpush2.msra.mxu0 0.0
  %1434 = vmatprep.subr.mxu0 0.0
  %1435 = vmatpush2.msra.mxu0 0.0
  %1436 = vmatprep.subr.mxu0 0.0
  %1437 = vmatpush2.msra.mxu0 0.0
  %1438 = vmatprep.subr.mxu0 0.0
  %1439 = vmatpush2.msra.mxu0 0.0
  %1440 = vmatprep.subr.mxu0 0.0
  %1441 = vmatpush2.msra.mxu0 0.0
  %1442 = vmatprep.subr.mxu0 0.0
  %1443 = vmatpush2.msra.mxu0 0.0
  %1444 = vmatprep.subr.mxu0 0.0
  %1445 = vmatpush2.msra.mxu0 0.0
  %1446 = vmatprep.subr.mxu0 0.0
  %1447 = vmatpush2.msra.mxu0 0.0
  %1448 = vmatprep.subr.mxu0 0.0
  %1449 = vmatpush2.msra.mxu0 0.0
  %1450 = vmatprep.subr.mxu0 0.0
  %1451 = vmatpush2.msra.mxu0 0.0
  %1452 = vmatprep.mubr.f32.mxu0 0.0
  %1453 = vmatmul.mubr.f32.gmra.mxu0 %v1316
  %v1454 = vpop.f32.mrf.mxu0
  %v1455 = vadd.f32 0.0, %v1454
  %v1456 = vpop.f32.mrf.mxu0
  %1457 = vdwg.mxu0
  %v1458 = vmul.f32 %v1455, 0.0006510417
  %v1459 = vmul.f32 %v1387, %v1387
  %v1460 = vsub.f32 %v1458, %v1459
  %v1461 = vadd.f32 %v1460, 1e-05
  %v1462 = vrsqrt.pop %v1461
  %v1463 = vmul.f32 %v1462, %v1040
  %v1464 = vlaneseq
  %v1465 = vshrl.u32 %v1464, 7
  %v1466 = vsub.s32 0, %v1465
  %v1467 = vrot.slane %v1463, %v1466
  %v1468 = vmul.f32 %v978, %v1467
  %v1469 = vmul.f32 %v981, %v1467
  %v1470 = vmul.f32 %v986, %v1467
  %v1471 = vmul.f32 %v989, %v1467
  %v1472 = vmul.f32 %v994, %v1467
  %v1473 = vmul.f32 %v997, %v1467
  %v1474 = vmul.f32 %v1002, %v1467
  %v1475 = vmul.f32 %v1005, %v1467
  %v1476 = vmul.f32 %v1010, %v1467
  %v1477 = vmul.f32 %v1013, %v1467
  %v1478 = vmul.f32 %v1018, %v1467
  %v1479 = vmul.f32 %v1021, %v1467
  %v1480 = vmul.f32 %v1387, %v1463
  %v1481 = vsub.f32 %v1041, %v1480
  %v1483 = vlaneseq
  %v1484 = vshrl.u32 %v1483, 7
  %v1485 = vsub.s32 0, %v1484
  %v1486 = vrot.slane %v1481, %v1485
  %v1488 = vadd.f32 %v1468, %v1486
  %v1489 = vadd.f32 %v1469, %v1486
  %v1490 = vadd.f32 %v1470, %v1486
  %v1491 = vadd.f32 %v1471, %v1486
  %v1492 = vadd.f32 %v1472, %v1486
  %v1493 = vadd.f32 %v1473, %v1486
  %v1494 = vadd.f32 %v1474, %v1486
  %v1495 = vadd.f32 %v1475, %v1486
  %v1496 = vadd.f32 %v1476, %v1486
  %v1497 = vadd.f32 %v1477, %v1486
  %v1498 = vadd.f32 %v1478, %v1486
  %v1499 = vadd.f32 %v1479, %v1486
  %v1500 = vadd.f32 %v1259, %v1488
  %v1501 = vadd.f32 %v1260, %v1489
  %v1502 = vadd.f32 %v1261, %v1490
  %v1503 = vadd.f32 %v1262, %v1491
  %v1504 = vadd.f32 %v1263, %v1492
  %v1505 = vadd.f32 %v1264, %v1493
  %v1506 = vadd.f32 %v1265, %v1494
  %v1507 = vadd.f32 %v1266, %v1495
  %v1508 = vadd.f32 %v1267, %v1496
  %v1509 = vadd.f32 %v1268, %v1497
  %v1510 = vadd.f32 %v1269, %v1498
  %v1511 = vadd.f32 %v1270, %v1499
  %1512 = vst [vmem:[%s9] sm:$0xff] %v1500
  %1513 = vst [vmem:[%s9 + $0x8] sm:$0xff] %v1501
  %1514 = vst [vmem:[%s9 + $0x10] sm:$0xff] %v1502
  %1515 = vst [vmem:[%s9 + $0x18] sm:$0xff] %v1503
  %1516 = vst [vmem:[%s9 + $0x20] sm:$0xff] %v1504
  %1517 = vst [vmem:[%s9 + $0x28] sm:$0xff] %v1505
  %1518 = vst [vmem:[%s9 + $0x30] sm:$0xff] %v1506
  %1519 = vst [vmem:[%s9 + $0x38] sm:$0xff] %v1507
  %1520 = vst [vmem:[%s9 + $0x40] sm:$0xff] %v1508
  %1521 = vst [vmem:[%s9 + $0x48] sm:$0xff] %v1509
  %1522 = vst [vmem:[%s9 + $0x50] sm:$0xff] %v1510
  %1523 = vst [vmem:[%s9 + $0x58] sm:$0xff] %v1511
  // Predicated region
  $region38: #{cnn_block_forward.1} parent=0 // pred_check
    _
  $region39: #{cnn_block_forward.1} parent=0 // pred_check_branch
    %1525 = sbr.rel (0) target = $region41
  $region40: #{cnn_block_forward.1} parent=0 // pred_region
    _
  $region41: #{cnn_block_forward.1} parent=0 // pred_fallthru
    _
  // Predicated region
  $region42: #{cnn_block_forward.1} parent=0 // pred_check
    _
  $region43: #{cnn_block_forward.1} parent=0 // pred_check_branch
    %1527 = sbr.rel (0) target = $region45
  $region44: #{cnn_block_forward.1} parent=0 // pred_region
    _
  $region45: #{cnn_block_forward.1} parent=0 // pred_fallthru
    _

</llo_original>
